<compile_context>
chip_gen: v5e
topology: v5e:2x2
jax: 0.10.0
libtpu: 0.0.40
codegen_flags: <defaults>
</compile_context>

<pallas_src>
import jax
import jax.numpy as jnp
from jax.experimental import pallas as pl
from jax.experimental.pallas import tpu as pltpu


# ----------------------------- helpers ---------------------------------------

def _layer_norm(x, w, b, eps=1e-5):
    mu = jnp.mean(x, axis=-1, keepdims=True)
    xc = x - mu
    var = jnp.mean(xc * xc, axis=-1, keepdims=True)
    return xc * jax.lax.rsqrt(var + eps) * w + b


def _vmem_cap():
    # v5e/v6e have 128 MiB physical VMEM -> allow large resident tiles;
    # be conservative elsewhere (v7x: 64 MiB physical).
    try:
        kind = jax.devices()[0].device_kind.lower()
    except Exception:
        return 48 << 20
    if "v5" in kind or "v6" in kind:
        return 100 << 20
    return 48 << 20


def _vmem_budget(nbytes, floor=8 << 20):
    return int(min(max(int(nbytes), floor), _vmem_cap()))


def _pick_tile(v):
    for c in (2048, 1024, 512, 256, 128):
        if v % c == 0:
            return c
    return v


def _round_up(v, m):
    return ((v + m - 1) // m) * m


# --------------------- transformer encoder (Pallas kernel) -------------------

def _make_encoder_layer_kernel(bt, S, D, H):
    dh = D // H
    N = bt * S

    def kernel(x_ref, mask_ref,
               wq_ref, wk_ref, wv_ref, bq_ref, bk_ref, bv_ref,
               wo_ref, bo_ref,
               ln1w_ref, ln1b_ref, ln2w_ref, ln2b_ref,
               w1_ref, b1_ref, w2_ref, b2_ref,
               out_ref, x_buf, o_scr):
        layer = pl.program_id(1)

        @pl.when(layer == 0)
        def _():
            x_buf[...] = x_ref[...]

        x = x_buf[...]                                    # (bt, S, D) f32 running acts
        x_bf = x.astype(jnp.bfloat16).reshape(N, D)       # bf16 MXU input

        # ---- fused full-width projections: three (N,D)@(D,D) MXU matmuls ----
        # (1/sqrt(dh) is pre-folded into wq/bq at pack time)
        q = jnp.dot(x_bf, wq_ref[0], preferred_element_type=jnp.float32) + bq_ref[0, 0]
        k = jnp.dot(x_bf, wk_ref[0], preferred_element_type=jnp.float32) + bk_ref[0, 0]
        v = jnp.dot(x_bf, wv_ref[0], preferred_element_type=jnp.float32) + bv_ref[0, 0]

        # head split once, kept as SSA values (h-major batched layout)
        def heads(t):                                     # (N, D) f32 -> (H*bt, S, dh) bf16
            return jnp.concatenate(
                [t[:, h * dh:(h + 1) * dh].reshape(bt, S, dh) for h in range(H)],
                axis=0).astype(jnp.bfloat16)

        qa, ka, va = heads(q), heads(k), heads(v)

        # ---- batched-head attention: one score matmul, one softmax, one PV ----
        s = jnp.einsum("bqd,bkd->bqk", qa, ka,
                       preferred_element_type=jnp.float32)        # (H*bt, S, S) f32
        m = jnp.broadcast_to(mask_ref[...][None],
                             (H, bt, 1, S)).reshape(H * bt, 1, S)
        s = s + m                            # additive float key-padding mask
        s = s - jnp.max(s, axis=-1, keepdims=True)
        p = jnp.exp(s)
        p = p * pl.reciprocal(jnp.sum(p, axis=-1, keepdims=True), approx=True)
        o = jnp.einsum("bqk,bkd->bqd", p.astype(jnp.bfloat16), va,
                       preferred_element_type=jnp.float32)        # (H*bt, S, dh)

        # ---- merge heads into (N, D) staging buffer; ONE full-K out-proj matmul ----
        for h in range(H):
            o_scr[:, h * dh:(h + 1) * dh] = (
                o[h * bt:(h + 1) * bt].reshape(N, dh).astype(jnp.bfloat16))
        attn = (jnp.dot(o_scr[...], wo_ref[0], preferred_element_type=jnp.float32)
                + bo_ref[0, 0]).reshape(bt, S, D)

        # ---- post-norm encoder layer (norm_first=False, relu); LN/softmax f32 ----
        x1 = _layer_norm(x + attn, ln1w_ref[0, 0], ln1b_ref[0, 0])

        x1_bf = x1.astype(jnp.bfloat16).reshape(N, D)
        hid = jnp.maximum(
            jnp.dot(x1_bf, w1_ref[0], preferred_element_type=jnp.float32)
            + b1_ref[0, 0], 0.0)
        ff = (jnp.dot(hid.astype(jnp.bfloat16), w2_ref[0],
                      preferred_element_type=jnp.float32)
              + b2_ref[0, 0]).reshape(bt, S, D)
        x2 = _layer_norm(x1 + ff, ln2w_ref[0, 0], ln2b_ref[0, 0])

        x_buf[...] = x2

        @pl.when(layer == pl.num_programs(1) - 1)
        def _():
            # BERTEncoder does `X += self.encoder(X)` (residual over the stack)
            out_ref[...] = x_ref[...] + x2

    return kernel


def transformer_encoder(x, mask_b, p, num_heads):
    B, S, D = x.shape
    H = num_heads
    L = p["wq_t"].shape[0]
    F = p["ffn_w1_t"].shape[2]

    bt = 1       # batch tile for the "parallel" axis (v7x: shards across 2 TCs)
    kernel = _make_encoder_layer_kernel(bt, S, D, H)

    weights = [p["wq_t"], p["wk_t"], p["wv_t"], p["bq"], p["bk"], p["bv"],
               p["out_w_t"], p["out_b"],
               p["ln1_w"], p["ln1_b"], p["ln2_w"], p["ln2_b"],
               p["ffn_w1_t"], p["ffn_b1"], p["ffn_w2_t"], p["ffn_b2"]]

    def stacked(arr):
        n_rest = arr.ndim - 1
        return pl.BlockSpec((1,) + arr.shape[1:],
                            lambda b, l, n=n_rest: (l,) + (0,) * n)

    x_spec = pl.BlockSpec((bt, S, D), lambda b, l: (b, 0, 0))
    mask_spec = pl.BlockSpec((bt, 1, S), lambda b, l: (b, 0, 0))
    out_spec = pl.BlockSpec((bt, S, D), lambda b, l: (b, 0, 0))   # resident over l

    # ---- explicit VMEM budget (double-buffered per-layer weights + activations) ----
    per_layer_w_bytes = sum(int(w.size // L) * w.dtype.itemsize for w in weights)
    act_bytes = 4 * bt * S * D
    mask_bytes = 4 * bt * S
    work_bytes = 3 * 4 * H * bt * S * S + 4 * bt * S * max(4 * D, D + F) * 4
    vmem_budget = _vmem_budget(
        2 * (per_layer_w_bytes + 2 * act_bytes + mask_bytes)
        + 2 * act_bytes + work_bytes + (4 << 20))

    # ---- advisory cost estimate for the XLA scheduler ----
    dh = D // H
    flops_layer = 2 * B * S * D * (4 * D + 2 * F) + 4 * H * B * S * S * dh
    cost = pl.CostEstimate(
        flops=int(L * flops_layer),
        transcendentals=int(L * H * B * S * (S + 1)),
        bytes_accessed=int(2 * 4 * B * S * D + 4 * B * S
                           + (B // bt) * L * per_layer_w_bytes))

    return pl.pallas_call(
        kernel,
        out_shape=jax.ShapeDtypeStruct((B, S, D), jnp.float32),
        grid=(B // bt, L),
        in_specs=[x_spec, mask_spec] + [stacked(w) for w in weights],
        out_specs=out_spec,
        scratch_shapes=[
            pltpu.VMEM((bt, S, D), jnp.float32),      # running activations
            pltpu.VMEM((bt * S, D), jnp.bfloat16),    # merged-heads staging buffer
        ],
        compiler_params=pltpu.CompilerParams(
            dimension_semantics=("parallel", "arbitrary"),
            vmem_limit_bytes=vmem_budget),
        cost_estimate=cost,
    )(x, mask_b, *weights)


# ----------------------------- MLM head kernel -------------------------------

def _mlm_kernel(x_ref, w1_ref, b1_ref, lnw_ref, lnb_ref, w2_ref, b2_ref,
                out_ref, h_buf):
    # fc1 + relu + LayerNorm computed once (vocab-tile 0), stashed in bf16 VMEM.
    @pl.when(pl.program_id(0) == 0)
    def _():
        xb = x_ref[...].astype(jnp.bfloat16)
        h = jnp.dot(xb, w1_ref[...], preferred_element_type=jnp.float32) + b1_ref[0]
        h = jnp.maximum(h, 0.0)
        h_buf[...] = _layer_norm(h, lnw_ref[0], lnb_ref[0]).astype(jnp.bfloat16)

    out_ref[...] = (jnp.dot(h_buf[...], w2_ref[...],
                            preferred_element_type=jnp.float32) + b2_ref[0])


def mlm_head(x_flat, p):
    N, D = x_flat.shape
    Mh = p["mlm_w1_t"].shape[1]
    Vp = p["mlm_w2_t"].shape[1]          # vocab padded to a 128/512 multiple
    V = p["vocab_size"]
    vt = _pick_tile(Vp)                  # lane-dense vocab tiles
    n_vt = Vp // vt

    per_tile_bytes = (N * D * 4 + D * Mh * 2 + 3 * Mh * 4
                      + Mh * vt * 2 + vt * 4 + N * vt * 4)
    vmem_budget = _vmem_budget(2 * per_tile_bytes + N * Mh * 2 + (2 << 20))
    cost = pl.CostEstimate(
        flops=int(2 * N * D * Mh + 2 * N * Mh * Vp),
        transcendentals=0,
        bytes_accessed=int(N * D * 4 + (D * Mh + Mh * Vp) * 2
                           + (3 * Mh + Vp) * 4 + N * Vp * 4))

    out = pl.pallas_call(
        _mlm_kernel,
        out_shape=jax.ShapeDtypeStruct((N, Vp), jnp.float32),
        grid=(n_vt,),
        in_specs=[
            pl.BlockSpec((N, D), lambda j: (0, 0)),
            pl.BlockSpec((D, Mh), lambda j: (0, 0)),
            pl.BlockSpec((1, Mh), lambda j: (0, 0)),
            pl.BlockSpec((1, Mh), lambda j: (0, 0)),
            pl.BlockSpec((1, Mh), lambda j: (0, 0)),
            pl.BlockSpec((Mh, vt), lambda j: (0, j)),
            pl.BlockSpec((1, vt), lambda j: (0, j)),
        ],
        out_specs=pl.BlockSpec((N, vt), lambda j: (0, j)),
        scratch_shapes=[pltpu.VMEM((N, Mh), jnp.bfloat16)],
        compiler_params=pltpu.CompilerParams(
            dimension_semantics=("arbitrary",),
            vmem_limit_bytes=vmem_budget),
        cost_estimate=cost,
    )(x_flat, p["mlm_w1_t"], p["mlm_b1"], p["mlm_lnw"], p["mlm_lnb"],
      p["mlm_w2_t"], p["mlm_b2"])
    # TODO(synk): at large N add a leading "parallel" row-tile grid axis (vocab axis
    # stays innermost/streamed) so v7x's 2 TCs get independent row tiles.
    return out[:, :V]


# ------------------------------- full forward --------------------------------

def bert_forward(params, tokens, segments, valid_lens=None, pred_position=None,
                 num_heads=2):
    B, S = tokens.shape
    max_len = params["pos_emb"].shape[1]
    # reference quirk: posi_embedding[:, seq_len, :] -> needs S < max_len
    assert S < max_len, "seq_len must be < max_len (reference indexes pos S)"

    # embedding gathers are glue (plain JAX)
    x = params["tok_emb"][tokens] + params["seg_emb"][segments]
    x = x + params["pos_emb"][0, S, :]          # single position broadcast (reference)
    x = x.astype(jnp.float32)

    if valid_lens is None:
        mask = jnp.zeros((B, S), jnp.float32)
    else:
        # float key_padding_mask: 1.0 at padding positions, added to logits
        mask = (jnp.arange(S)[None, :] >= valid_lens[:, None]).astype(jnp.float32)
    mask_b = mask[:, None, :]                   # (B, 1, S); kernel broadcasts to heads

    encoded = transformer_encoder(x, mask_b, params, num_heads)

    mlm_y = None
    if pred_position is not None:
        P = pred_position.shape[1]
        batch_idx = jnp.repeat(jnp.arange(B), P)
        masked_x = encoded[batch_idx, pred_position.reshape(-1)]     # (B*P, D)
        mlm_y = mlm_head(masked_x, params).reshape(B, P, -1)

    # NSP head: a (B,2) matmul is far below pallas_call fixed overhead (perf
    # review) -> plain XLA.
    nsp_y = encoded[:, 0, :] @ params["nsp_w_t"] + params["nsp_b"][0]
    return encoded, mlm_y, nsp_y


# ------------------------------ parameter init --------------------------------

def init_params(key, vocab, d, ffn, layers, mlm_hidden, max_len):
    """Random init in the PyTorch (out_features, in_features) convention."""
    ks = jax.random.split(key, 10)

    def nrm(k, shape, s=0.02):
        return jax.random.normal(k, shape, jnp.float32) * s

    return dict(
        tok_emb=nrm(ks[0], (vocab, d), 1.0),
        seg_emb=nrm(ks[1], (2, d), 1.0),
        pos_emb=nrm(ks[2], (1, max_len, d), 1.0),
        in_w=nrm(ks[3], (layers, 3 * d, d)),       # in_proj_weight (q|k|v rows)
        in_b=jnp.zeros((layers, 3 * d), jnp.float32),
        out_w=nrm(ks[4], (layers, d, d)),          # out_proj.weight
        out_b=jnp.zeros((layers, 1, d), jnp.float32),
        ln1_w=jnp.ones((layers, 1, d), jnp.float32),
        ln1_b=jnp.zeros((layers, 1, d), jnp.float32),
        ln2_w=jnp.ones((layers, 1, d), jnp.float32),
        ln2_b=jnp.zeros((layers, 1, d), jnp.float32),
        ffn_w1=nrm(ks[5], (layers, ffn, d)),
        ffn_b1=jnp.zeros((layers, 1, ffn), jnp.float32),
        ffn_w2=nrm(ks[6], (layers, d, ffn)),
        ffn_b2=jnp.zeros((layers, 1, d), jnp.float32),
        mlm_w1=nrm(ks[7], (mlm_hidden, d)),
        mlm_b1=jnp.zeros((1, mlm_hidden), jnp.float32),
        mlm_lnw=jnp.ones((1, mlm_hidden), jnp.float32),
        mlm_lnb=jnp.zeros((1, mlm_hidden), jnp.float32),
        mlm_w2=nrm(ks[8], (vocab, mlm_hidden)),
        mlm_b2=jnp.zeros((1, vocab), jnp.float32),
        nsp_w=nrm(ks[9], (2, d)),
        nsp_b=jnp.zeros((1, 2), jnp.float32),
    )


def pack_params(raw, num_heads):
    """One-time conversion: pre-transpose to (in, out), keep Q/K/V/out-proj FULL
    WIDTH (L, D, D), fold 1/sqrt(dh) into Wq/bq, pad MLM vocab to a lane-dense
    multiple, cast matmul weights to bf16 (biases/LN stay f32)."""
    L, threeD, D = raw["in_w"].shape
    H = num_heads
    dh = D // H
    scale = 1.0 / float(dh) ** 0.5
    bf16 = jnp.bfloat16

    in_w_t = jnp.swapaxes(raw["in_w"], 1, 2)            # (L, D_in, 3D_out)
    in_b = raw["in_b"]

    V, Mh = raw["mlm_w2"].shape
    Vp = _round_up(V, 512) if V >= 512 else _round_up(V, 128)
    mlm_w2_t = raw["mlm_w2"].T                          # (Mh, V)
    mlm_b2 = raw["mlm_b2"]                              # (1, V)
    if Vp != V:
        mlm_w2_t = jnp.pad(mlm_w2_t, ((0, 0), (0, Vp - V)))
        mlm_b2 = jnp.pad(mlm_b2, ((0, 0), (0, Vp - V)))

    # TODO(synk): on v7x consider fp8 storage for ffn_w1/ffn_w2/mlm_w2 behind a flag.
    return dict(
        tok_emb=raw["tok_emb"], seg_emb=raw["seg_emb"], pos_emb=raw["pos_emb"],
        wq_t=(in_w_t[:, :, 0:D] * scale).astype(bf16),
        wk_t=in_w_t[:, :, D:2 * D].astype(bf16),
        wv_t=in_w_t[:, :, 2 * D:3 * D].astype(bf16),
        bq=(in_b[:, 0:D] * scale).reshape(L, 1, D),
        bk=in_b[:, D:2 * D].reshape(L, 1, D),
        bv=in_b[:, 2 * D:3 * D].reshape(L, 1, D),
        out_w_t=jnp.swapaxes(raw["out_w"], 1, 2).astype(bf16),
        out_b=raw["out_b"],
        ln1_w=raw["ln1_w"], ln1_b=raw["ln1_b"],
        ln2_w=raw["ln2_w"], ln2_b=raw["ln2_b"],
        ffn_w1_t=jnp.swapaxes(raw["ffn_w1"], 1, 2).astype(bf16),
        ffn_b1=raw["ffn_b1"],
        ffn_w2_t=jnp.swapaxes(raw["ffn_w2"], 1, 2).astype(bf16),
        ffn_b2=raw["ffn_b2"],
        mlm_w1_t=raw["mlm_w1"].T.astype(bf16), mlm_b1=raw["mlm_b1"],
        mlm_lnw=raw["mlm_lnw"], mlm_lnb=raw["mlm_lnb"],
        mlm_w2_t=mlm_w2_t.astype(bf16), mlm_b2=mlm_b2,
        nsp_w_t=raw["nsp_w"].T, nsp_b=raw["nsp_b"],
        vocab_size=int(V),
    )


# ----------------------------------- main -------------------------------------

if __name__ == "__main__":
    VOCAB, D, FFN, HEADS, LAYERS = 128, 32, 64, 2, 2
    MLM_HIDDEN, MAX_LEN = 64, 64          # nsp_inputs == D
    B, S, P = 2, 8, 3
    # dropout = 0.0 (identity; deterministic forward)

    raw = init_params(jax.random.PRNGKey(0), VOCAB, D, FFN, LAYERS,
                      MLM_HIDDEN, MAX_LEN)
    params = pack_params(raw, num_heads=HEADS)

    kt = jax.random.PRNGKey(1)
    tokens = jax.random.randint(kt, (B, S), 0, VOCAB, dtype=jnp.int32)
    segments = jnp.concatenate(
        [jnp.zeros((B, S // 2), jnp.int32), jnp.ones((B, S - S // 2), jnp.int32)],
        axis=1)
    valid_lens = jnp.array([S, S - 2], jnp.int32)
    pred_position = jnp.array([[1, 3, 5], [0, 2, 6]], jnp.int32)

    encoded, mlm_y, nsp_y = bert_forward(params, tokens, segments,
                                         valid_lens=valid_lens,
                                         pred_position=pred_position,
                                         num_heads=HEADS)
    jax.block_until_ready((encoded, mlm_y, nsp_y))

    assert encoded.shape == (B, S, D)
    assert mlm_y.shape == (B, P, VOCAB)
    assert nsp_y.shape == (B, 2)
    print("KERNEL_OK")
</pallas_src>

<mosaic_0001>
module attributes {stable_mosaic.version = 11 : i64} {
  func.func @kernel(%arg0: i32, %arg1: i32, %arg2: memref<1x8x32xf32, #tpu.memory_space<vmem>>, %arg3: memref<1x1x8xf32, #tpu.memory_space<vmem>>, %arg4: memref<1x32x32xbf16, #tpu.memory_space<vmem>>, %arg5: memref<1x32x32xbf16, #tpu.memory_space<vmem>>, %arg6: memref<1x32x32xbf16, #tpu.memory_space<vmem>>, %arg7: memref<1x1x32xf32, #tpu.memory_space<vmem>>, %arg8: memref<1x1x32xf32, #tpu.memory_space<vmem>>, %arg9: memref<1x1x32xf32, #tpu.memory_space<vmem>>, %arg10: memref<1x32x32xbf16, #tpu.memory_space<vmem>>, %arg11: memref<1x1x32xf32, #tpu.memory_space<vmem>>, %arg12: memref<1x1x32xf32, #tpu.memory_space<vmem>>, %arg13: memref<1x1x32xf32, #tpu.memory_space<vmem>>, %arg14: memref<1x1x32xf32, #tpu.memory_space<vmem>>, %arg15: memref<1x1x32xf32, #tpu.memory_space<vmem>>, %arg16: memref<1x32x64xbf16, #tpu.memory_space<vmem>>, %arg17: memref<1x1x64xf32, #tpu.memory_space<vmem>>, %arg18: memref<1x64x32xbf16, #tpu.memory_space<vmem>>, %arg19: memref<1x1x32xf32, #tpu.memory_space<vmem>>, %arg20: memref<1x8x32xf32, #tpu.memory_space<vmem>>, %arg21: memref<1x8x32xf32, #tpu.memory_space<vmem>>, %arg22: memref<8x32xbf16, #tpu.memory_space<vmem>>) attributes {dimension_semantics = [#tpu.dimension_semantics<parallel>, #tpu.dimension_semantics<arbitrary>], iteration_bounds = array<i64: 2, 2>, scalar_prefetch = 0 : i64, scratch_operands = 2 : i64, tpu.core_type = #tpu.core_type<tc>, window_params = [{transform_indices = @transform_0, window_bounds = array<i64: 1, 8, 32>}, {transform_indices = @transform_1, window_bounds = array<i64: 1, 1, 8>}, {transform_indices = @transform_2, window_bounds = array<i64: 1, 32, 32>}, {transform_indices = @transform_3, window_bounds = array<i64: 1, 32, 32>}, {transform_indices = @transform_4, window_bounds = array<i64: 1, 32, 32>}, {transform_indices = @transform_5, window_bounds = array<i64: 1, 1, 32>}, {transform_indices = @transform_6, window_bounds = array<i64: 1, 1, 32>}, {transform_indices = @transform_7, window_bounds = array<i64: 1, 1, 32>}, {transform_indices = @transform_8, window_bounds = array<i64: 1, 32, 32>}, {transform_indices = @transform_9, window_bounds = array<i64: 1, 1, 32>}, {transform_indices = @transform_10, window_bounds = array<i64: 1, 1, 32>}, {transform_indices = @transform_11, window_bounds = array<i64: 1, 1, 32>}, {transform_indices = @transform_12, window_bounds = array<i64: 1, 1, 32>}, {transform_indices = @transform_13, window_bounds = array<i64: 1, 1, 32>}, {transform_indices = @transform_14, window_bounds = array<i64: 1, 32, 64>}, {transform_indices = @transform_15, window_bounds = array<i64: 1, 1, 64>}, {transform_indices = @transform_16, window_bounds = array<i64: 1, 64, 32>}, {transform_indices = @transform_17, window_bounds = array<i64: 1, 1, 32>}, {transform_indices = @transform_18, window_bounds = array<i64: 1, 8, 32>}]} {
    %c0_i32 = arith.constant 0 : i32
    %0 = arith.cmpi eq, %arg1, %c0_i32 : i32
    %1 = arith.extui %0 : i1 to i32
    %c0_i32_0 = arith.constant 0 : i32
    %2 = arith.cmpi ne, %1, %c0_i32_0 : i32
    scf.if %2 {
      %c0_83 = arith.constant 0 : index
      %c0_84 = arith.constant 0 : index
      %c0_85 = arith.constant 0 : index
      %166 = vector.load %arg2[%c0_83, %c0_84, %c0_85] : memref<1x8x32xf32, #tpu.memory_space<vmem>>, vector<1x8x32xf32>
      %c0_86 = arith.constant 0 : index
      %c0_87 = arith.constant 0 : index
      %c0_88 = arith.constant 0 : index
      %167 = vector.load %arg21[%c0_86, %c0_87, %c0_88] : memref<1x8x32xf32, #tpu.memory_space<vmem>>, vector<1x8x32xf32>
      tpu.vector_store %arg21[%c0_86, %c0_87, %c0_88], %166 {strides = array<i32>} : memref<1x8x32xf32, #tpu.memory_space<vmem>>, vector<1x8x32xf32>,
    } else {
    }
    %c0 = arith.constant 0 : index
    %c0_1 = arith.constant 0 : index
    %c0_2 = arith.constant 0 : index
    %3 = vector.load %arg21[%c0, %c0_1, %c0_2] : memref<1x8x32xf32, #tpu.memory_space<vmem>>, vector<1x8x32xf32>
    %4 = arith.truncf %3 : vector<1x8x32xf32> to vector<1x8x32xbf16>
    %5 = vector.shape_cast %4 : vector<1x8x32xbf16> to vector<8x32xbf16>
    %c0_3 = arith.constant 0 : index
    %c0_4 = arith.constant 0 : index
    %c0_5 = arith.constant 0 : index
    %6 = vector.load %arg4[%c0_3, %c0_4, %c0_5] : memref<1x32x32xbf16, #tpu.memory_space<vmem>>, vector<1x32x32xbf16>
    %7 = vector.shape_cast %6 : vector<1x32x32xbf16> to vector<32x32xbf16>
    %cst = arith.constant dense<0.000000e+00> : vector<8x32xf32>
    %8 = tpu.matmul %5, %7, %cst {dimension_numbers = #tpu.dot_dimension_numbers<[1], [0], [0], [1], [0, 0, 1, 1], [], []>} : vector<8x32xbf16>, vector<32x32xbf16>, vector<8x32xf32> -> vector<8x32xf32>
    %c0_6 = arith.constant 0 : index
    %c0_7 = arith.constant 0 : index
    %c0_8 = arith.constant 0 : index
    %9 = vector.load %arg7[%c0_6, %c0_7, %c0_8] : memref<1x1x32xf32, #tpu.memory_space<vmem>>, vector<1x1x32xf32>
    %10 = vector.shape_cast %9 : vector<1x1x32xf32> to vector<32xf32>
    %11 = vector.shape_cast %10 : vector<32xf32> to vector<1x32xf32>
    %12 = vector.broadcast %11 : vector<1x32xf32> to vector<8x32xf32>
    %13 = arith.addf %8, %12 : vector<8x32xf32>
    %c0_9 = arith.constant 0 : index
    %c0_10 = arith.constant 0 : index
    %c0_11 = arith.constant 0 : index
    %14 = vector.load %arg5[%c0_9, %c0_10, %c0_11] : memref<1x32x32xbf16, #tpu.memory_space<vmem>>, vector<1x32x32xbf16>
    %15 = vector.shape_cast %14 : vector<1x32x32xbf16> to vector<32x32xbf16>
    %cst_12 = arith.constant dense<0.000000e+00> : vector<8x32xf32>
    %16 = tpu.matmul %5, %15, %cst_12 {dimension_numbers = #tpu.dot_dimension_numbers<[1], [0], [0], [1], [0, 0, 1, 1], [], []>} : vector<8x32xbf16>, vector<32x32xbf16>, vector<8x32xf32> -> vector<8x32xf32>
    %c0_13 = arith.constant 0 : index
    %c0_14 = arith.constant 0 : index
    %c0_15 = arith.constant 0 : index
    %17 = vector.load %arg8[%c0_13, %c0_14, %c0_15] : memref<1x1x32xf32, #tpu.memory_space<vmem>>, vector<1x1x32xf32>
    %18 = vector.shape_cast %17 : vector<1x1x32xf32> to vector<32xf32>
    %19 = vector.shape_cast %18 : vector<32xf32> to vector<1x32xf32>
    %20 = vector.broadcast %19 : vector<1x32xf32> to vector<8x32xf32>
    %21 = arith.addf %16, %20 : vector<8x32xf32>
    %c0_16 = arith.constant 0 : index
    %c0_17 = arith.constant 0 : index
    %c0_18 = arith.constant 0 : index
    %22 = vector.load %arg6[%c0_16, %c0_17, %c0_18] : memref<1x32x32xbf16, #tpu.memory_space<vmem>>, vector<1x32x32xbf16>
    %23 = vector.shape_cast %22 : vector<1x32x32xbf16> to vector<32x32xbf16>
    %cst_19 = arith.constant dense<0.000000e+00> : vector<8x32xf32>
    %24 = tpu.matmul %5, %23, %cst_19 {dimension_numbers = #tpu.dot_dimension_numbers<[1], [0], [0], [1], [0, 0, 1, 1], [], []>} : vector<8x32xbf16>, vector<32x32xbf16>, vector<8x32xf32> -> vector<8x32xf32>
    %c0_20 = arith.constant 0 : index
    %c0_21 = arith.constant 0 : index
    %c0_22 = arith.constant 0 : index
    %25 = vector.load %arg9[%c0_20, %c0_21, %c0_22] : memref<1x1x32xf32, #tpu.memory_space<vmem>>, vector<1x1x32xf32>
    %26 = vector.shape_cast %25 : vector<1x1x32xf32> to vector<32xf32>
    %27 = vector.shape_cast %26 : vector<32xf32> to vector<1x32xf32>
    %28 = vector.broadcast %27 : vector<1x32xf32> to vector<8x32xf32>
    %29 = arith.addf %24, %28 : vector<8x32xf32>
    %30 = vector.extract_strided_slice %13 {offsets = [0, 0], sizes = [8, 16], strides = [1, 1]} : vector<8x32xf32> to vector<8x16xf32>
    %31 = vector.shape_cast %30 : vector<8x16xf32> to vector<1x8x16xf32>
    %32 = vector.extract_strided_slice %13 {offsets = [0, 16], sizes = [8, 16], strides = [1, 1]} : vector<8x32xf32> to vector<8x16xf32>
    %33 = vector.shape_cast %32 : vector<8x16xf32> to vector<1x8x16xf32>
    %34 = tpu.concatenate %31, %33 in 0 : vector<1x8x16xf32>, vector<1x8x16xf32> -> vector<2x8x16xf32>
    %35 = arith.truncf %34 : vector<2x8x16xf32> to vector<2x8x16xbf16>
    %36 = vector.extract_strided_slice %21 {offsets = [0, 0], sizes = [8, 16], strides = [1, 1]} : vector<8x32xf32> to vector<8x16xf32>
    %37 = vector.shape_cast %36 : vector<8x16xf32> to vector<1x8x16xf32>
    %38 = vector.extract_strided_slice %21 {offsets = [0, 16], sizes = [8, 16], strides = [1, 1]} : vector<8x32xf32> to vector<8x16xf32>
    %39 = vector.shape_cast %38 : vector<8x16xf32> to vector<1x8x16xf32>
    %40 = tpu.concatenate %37, %39 in 0 : vector<1x8x16xf32>, vector<1x8x16xf32> -> vector<2x8x16xf32>
    %41 = arith.truncf %40 : vector<2x8x16xf32> to vector<2x8x16xbf16>
    %42 = vector.extract_strided_slice %29 {offsets = [0, 0], sizes = [8, 16], strides = [1, 1]} : vector<8x32xf32> to vector<8x16xf32>
    %43 = vector.shape_cast %42 : vector<8x16xf32> to vector<1x8x16xf32>
    %44 = vector.extract_strided_slice %29 {offsets = [0, 16], sizes = [8, 16], strides = [1, 1]} : vector<8x32xf32> to vector<8x16xf32>
    %45 = vector.shape_cast %44 : vector<8x16xf32> to vector<1x8x16xf32>
    %46 = tpu.concatenate %43, %45 in 0 : vector<1x8x16xf32>, vector<1x8x16xf32> -> vector<2x8x16xf32>
    %47 = arith.truncf %46 : vector<2x8x16xf32> to vector<2x8x16xbf16>
    "tpu.trace_start"() <{level = 10 : i32, message = "bqd,bkd->bqk"}> : () -> ()
    %cst_23 = arith.constant dense<0.000000e+00> : vector<2x8x8xf32>
    %48 = tpu.matmul %35, %41, %cst_23 {dimension_numbers = #tpu.dot_dimension_numbers<[2], [2], [1], [1], [0, 0, 0, 1, 1, 1], [0], [0]>} : vector<2x8x16xbf16>, vector<2x8x16xbf16>, vector<2x8x8xf32> -> vector<2x8x8xf32>
    "tpu.trace_stop"() : () -> ()
    %c0_24 = arith.constant 0 : index
    %c0_25 = arith.constant 0 : index
    %c0_26 = arith.constant 0 : index
    %49 = vector.load %arg3[%c0_24, %c0_25, %c0_26] : memref<1x1x8xf32, #tpu.memory_space<vmem>>, vector<1x1x8xf32>
    %50 = vector.shape_cast %49 : vector<1x1x8xf32> to vector<1x1x1x8xf32>
    %51 = vector.shape_cast %50 : vector<1x1x1x8xf32> to vector<1x1x1x8xf32>
    %52 = vector.broadcast %51 : vector<1x1x1x8xf32> to vector<2x1x1x8xf32>
    %53 = vector.shape_cast %52 : vector<2x1x1x8xf32> to vector<2x1x8xf32>
    %54 = vector.broadcast %53 : vector<2x1x8xf32> to vector<2x8x8xf32>
    %55 = arith.addf %48, %54 : vector<2x8x8xf32>
    %cst_27 = arith.constant dense<0xFF800000> : vector<2x8xf32>
    %56 = vector.multi_reduction <maximumf>, %55, %cst_27 [2] : vector<2x8x8xf32> to vector<2x8xf32>
    %57 = vector.shape_cast %56 : vector<2x8xf32> to vector<2x8x1xf32>
    %58 = vector.broadcast %57 : vector<2x8x1xf32> to vector<2x8x8xf32>
    %59 = arith.subf %55, %58 : vector<2x8x8xf32>
    %60 = math.exp %59 : vector<2x8x8xf32>
    %cst_28 = arith.constant dense<0.000000e+00> : vector<2x8xf32>
    %61 = vector.multi_reduction <add>, %60, %cst_28 [2] : vector<2x8x8xf32> to vector<2x8xf32>
    %62 = vector.shape_cast %61 : vector<2x8xf32> to vector<2x8x1xf32>
    %63 = tpu.reciprocal %62 {approx = true} : vector<2x8x1xf32> -> vector<2x8x1xf32>
    %64 = vector.broadcast %63 : vector<2x8x1xf32> to vector<2x8x8xf32>
    %65 = arith.mulf %60, %64 : vector<2x8x8xf32>
    %66 = arith.truncf %65 : vector<2x8x8xf32> to vector<2x8x8xbf16>
    "tpu.trace_start"() <{level = 10 : i32, message = "bqk,bkd->bqd"}> : () -> ()
    %cst_29 = arith.constant dense<0.000000e+00> : vector<2x8x16xf32>
    %67 = tpu.matmul %66, %47, %cst_29 {dimension_numbers = #tpu.dot_dimension_numbers<[2], [1], [1], [2], [0, 0, 0, 1, 1, 2], [0], [0]>} : vector<2x8x8xbf16>, vector<2x8x16xbf16>, vector<2x8x16xf32> -> vector<2x8x16xf32>
    "tpu.trace_stop"() : () -> ()
    %68 = vector.extract_strided_slice %67 {offsets = [0, 0, 0], sizes = [1, 8, 16], strides = [1, 1, 1]} : vector<2x8x16xf32> to vector<1x8x16xf32>
    %69 = vector.shape_cast %68 : vector<1x8x16xf32> to vector<8x16xf32>
    %70 = arith.truncf %69 : vector<8x16xf32> to vector<8x16xbf16>
    %c0_30 = arith.constant 0 : index
    %c0_31 = arith.constant 0 : index
    %71 = vector.load %arg22[%c0_30, %c0_31] : memref<8x32xbf16, #tpu.memory_space<vmem>>, vector<8x16xbf16>
    tpu.vector_store %arg22[%c0_30, %c0_31], %70 {strides = array<i32>} : memref<8x32xbf16, #tpu.memory_space<vmem>>, vector<8x16xbf16>,
    %72 = vector.extract_strided_slice %67 {offsets = [1, 0, 0], sizes = [1, 8, 16], strides = [1, 1, 1]} : vector<2x8x16xf32> to vector<1x8x16xf32>
    %73 = vector.shape_cast %72 : vector<1x8x16xf32> to vector<8x16xf32>
    %74 = arith.truncf %73 : vector<8x16xf32> to vector<8x16xbf16>
    %c0_32 = arith.constant 0 : index
    %c16 = arith.constant 16 : index
    %75 = vector.load %arg22[%c0_32, %c16] : memref<8x32xbf16, #tpu.memory_space<vmem>>, vector<8x16xbf16>
    tpu.vector_store %arg22[%c0_32, %c16], %74 {strides = array<i32>} : memref<8x32xbf16, #tpu.memory_space<vmem>>, vector<8x16xbf16>,
    %c0_33 = arith.constant 0 : index
    %c0_34 = arith.constant 0 : index
    %76 = vector.load %arg22[%c0_33, %c0_34] : memref<8x32xbf16, #tpu.memory_space<vmem>>, vector<8x32xbf16>
    %c0_35 = arith.constant 0 : index
    %c0_36 = arith.constant 0 : index
    %c0_37 = arith.constant 0 : index
    %77 = vector.load %arg10[%c0_35, %c0_36, %c0_37] : memref<1x32x32xbf16, #tpu.memory_space<vmem>>, vector<1x32x32xbf16>
    %78 = vector.shape_cast %77 : vector<1x32x32xbf16> to vector<32x32xbf16>
    %cst_38 = arith.constant dense<0.000000e+00> : vector<8x32xf32>
    %79 = tpu.matmul %76, %78, %cst_38 {dimension_numbers = #tpu.dot_dimension_numbers<[1], [0], [0], [1], [0, 0, 1, 1], [], []>} : vector<8x32xbf16>, vector<32x32xbf16>, vector<8x32xf32> -> vector<8x32xf32>
    %c0_39 = arith.constant 0 : index
    %c0_40 = arith.constant 0 : index
    %c0_41 = arith.constant 0 : index
    %80 = vector.load %arg11[%c0_39, %c0_40, %c0_41] : memref<1x1x32xf32, #tpu.memory_space<vmem>>, vector<1x1x32xf32>
    %81 = vector.shape_cast %80 : vector<1x1x32xf32> to vector<32xf32>
    %82 = vector.shape_cast %81 : vector<32xf32> to vector<1x32xf32>
    %83 = vector.broadcast %82 : vector<1x32xf32> to vector<8x32xf32>
    %84 = arith.addf %79, %83 : vector<8x32xf32>
    %85 = vector.shape_cast %84 : vector<8x32xf32> to vector<1x8x32xf32>
    %86 = arith.addf %3, %85 : vector<1x8x32xf32>
    %c0_42 = arith.constant 0 : index
    %c0_43 = arith.constant 0 : index
    %c0_44 = arith.constant 0 : index
    %87 = vector.load %arg12[%c0_42, %c0_43, %c0_44] : memref<1x1x32xf32, #tpu.memory_space<vmem>>, vector<1x1x32xf32>
    %88 = vector.shape_cast %87 : vector<1x1x32xf32> to vector<32xf32>
    %c0_45 = arith.constant 0 : index
    %c0_46 = arith.constant 0 : index
    %c0_47 = arith.constant 0 : index
    %89 = vector.load %arg13[%c0_45, %c0_46, %c0_47] : memref<1x1x32xf32, #tpu.memory_space<vmem>>, vector<1x1x32xf32>
    %90 = vector.shape_cast %89 : vector<1x1x32xf32> to vector<32xf32>
    %cst_48 = arith.constant dense<0.000000e+00> : vector<1x8xf32>
    %91 = vector.multi_reduction <add>, %86, %cst_48 [2] : vector<1x8x32xf32> to vector<1x8xf32>
    %92 = vector.shape_cast %91 : vector<1x8xf32> to vector<1x8x1xf32>
    %cst_49 = arith.constant 3.200000e+01 : f32
    %93 = vector.broadcast %cst_49 : f32 to vector<1x8x1xf32>
    %94 = arith.divf %92, %93 : vector<1x8x1xf32>
    %95 = vector.broadcast %94 : vector<1x8x1xf32> to vector<1x8x32xf32>
    %96 = arith.subf %86, %95 : vector<1x8x32xf32>
    %97 = arith.mulf %96, %96 : vector<1x8x32xf32>
    %cst_50 = arith.constant dense<0.000000e+00> : vector<1x8xf32>
    %98 = vector.multi_reduction <add>, %97, %cst_50 [2] : vector<1x8x32xf32> to vector<1x8xf32>
    %99 = vector.shape_cast %98 : vector<1x8xf32> to vector<1x8x1xf32>
    %cst_51 = arith.constant 3.200000e+01 : f32
    %100 = vector.broadcast %cst_51 : f32 to vector<1x8x1xf32>
    %101 = arith.divf %99, %100 : vector<1x8x1xf32>
    %cst_52 = arith.constant 9.99999974E-6 : f32
    %102 = vector.broadcast %cst_52 : f32 to vector<1x8x1xf32>
    %103 = arith.addf %101, %102 : vector<1x8x1xf32>
    %104 = math.rsqrt %103 : vector<1x8x1xf32>
    %105 = vector.broadcast %104 : vector<1x8x1xf32> to vector<1x8x32xf32>
    %106 = arith.mulf %96, %105 : vector<1x8x32xf32>
    %107 = vector.shape_cast %88 : vector<32xf32> to vector<1x1x32xf32>
    %108 = vector.broadcast %107 : vector<1x1x32xf32> to vector<1x8x32xf32>
    %109 = arith.mulf %106, %108 : vector<1x8x32xf32>
    %110 = vector.shape_cast %90 : vector<32xf32> to vector<1x1x32xf32>
    %111 = vector.broadcast %110 : vector<1x1x32xf32> to vector<1x8x32xf32>
    %112 = arith.addf %109, %111 : vector<1x8x32xf32>
    %113 = arith.truncf %112 : vector<1x8x32xf32> to vector<1x8x32xbf16>
    %114 = vector.shape_cast %113 : vector<1x8x32xbf16> to vector<8x32xbf16>
    %c0_53 = arith.constant 0 : index
    %c0_54 = arith.constant 0 : index
    %c0_55 = arith.constant 0 : index
    %115 = vector.load %arg16[%c0_53, %c0_54, %c0_55] : memref<1x32x64xbf16, #tpu.memory_space<vmem>>, vector<1x32x64xbf16>
    %116 = vector.shape_cast %115 : vector<1x32x64xbf16> to vector<32x64xbf16>
    %cst_56 = arith.constant dense<0.000000e+00> : vector<8x64xf32>
    %117 = tpu.matmul %114, %116, %cst_56 {dimension_numbers = #tpu.dot_dimension_numbers<[1], [0], [0], [1], [0, 0, 1, 1], [], []>} : vector<8x32xbf16>, vector<32x64xbf16>, vector<8x64xf32> -> vector<8x64xf32>
    %c0_57 = arith.constant 0 : index
    %c0_58 = arith.constant 0 : index
    %c0_59 = arith.constant 0 : index
    %118 = vector.load %arg17[%c0_57, %c0_58, %c0_59] : memref<1x1x64xf32, #tpu.memory_space<vmem>>, vector<1x1x64xf32>
    %119 = vector.shape_cast %118 : vector<1x1x64xf32> to vector<64xf32>
    %120 = vector.shape_cast %119 : vector<64xf32> to vector<1x64xf32>
    %121 = vector.broadcast %120 : vector<1x64xf32> to vector<8x64xf32>
    %122 = arith.addf %117, %121 : vector<8x64xf32>
    %cst_60 = arith.constant 0.000000e+00 : f32
    %123 = vector.broadcast %cst_60 : f32 to vector<8x64xf32>
    %124 = arith.maximumf %122, %123 : vector<8x64xf32>
    %125 = arith.truncf %124 : vector<8x64xf32> to vector<8x64xbf16>
    %c0_61 = arith.constant 0 : index
    %c0_62 = arith.constant 0 : index
    %c0_63 = arith.constant 0 : index
    %126 = vector.load %arg18[%c0_61, %c0_62, %c0_63] : memref<1x64x32xbf16, #tpu.memory_space<vmem>>, vector<1x64x32xbf16>
    %127 = vector.shape_cast %126 : vector<1x64x32xbf16> to vector<64x32xbf16>
    %cst_64 = arith.constant dense<0.000000e+00> : vector<8x32xf32>
    %128 = tpu.matmul %125, %127, %cst_64 {dimension_numbers = #tpu.dot_dimension_numbers<[1], [0], [0], [1], [0, 0, 1, 1], [], []>} : vector<8x64xbf16>, vector<64x32xbf16>, vector<8x32xf32> -> vector<8x32xf32>
    %c0_65 = arith.constant 0 : index
    %c0_66 = arith.constant 0 : index
    %c0_67 = arith.constant 0 : index
    %129 = vector.load %arg19[%c0_65, %c0_66, %c0_67] : memref<1x1x32xf32, #tpu.memory_space<vmem>>, vector<1x1x32xf32>
    %130 = vector.shape_cast %129 : vector<1x1x32xf32> to vector<32xf32>
    %131 = vector.shape_cast %130 : vector<32xf32> to vector<1x32xf32>
    %132 = vector.broadcast %131 : vector<1x32xf32> to vector<8x32xf32>
    %133 = arith.addf %128, %132 : vector<8x32xf32>
    %134 = vector.shape_cast %133 : vector<8x32xf32> to vector<1x8x32xf32>
    %135 = arith.addf %112, %134 : vector<1x8x32xf32>
    %c0_68 = arith.constant 0 : index
    %c0_69 = arith.constant 0 : index
    %c0_70 = arith.constant 0 : index
    %136 = vector.load %arg14[%c0_68, %c0_69, %c0_70] : memref<1x1x32xf32, #tpu.memory_space<vmem>>, vector<1x1x32xf32>
    %137 = vector.shape_cast %136 : vector<1x1x32xf32> to vector<32xf32>
    %c0_71 = arith.constant 0 : index
    %c0_72 = arith.constant 0 : index
    %c0_73 = arith.constant 0 : index
    %138 = vector.load %arg15[%c0_71, %c0_72, %c0_73] : memref<1x1x32xf32, #tpu.memory_space<vmem>>, vector<1x1x32xf32>
    %139 = vector.shape_cast %138 : vector<1x1x32xf32> to vector<32xf32>
    %cst_74 = arith.constant dense<0.000000e+00> : vector<1x8xf32>
    %140 = vector.multi_reduction <add>, %135, %cst_74 [2] : vector<1x8x32xf32> to vector<1x8xf32>
    %141 = vector.shape_cast %140 : vector<1x8xf32> to vector<1x8x1xf32>
    %cst_75 = arith.constant 3.200000e+01 : f32
    %142 = vector.broadcast %cst_75 : f32 to vector<1x8x1xf32>
    %143 = arith.divf %141, %142 : vector<1x8x1xf32>
    %144 = vector.broadcast %143 : vector<1x8x1xf32> to vector<1x8x32xf32>
    %145 = arith.subf %135, %144 : vector<1x8x32xf32>
    %146 = arith.mulf %145, %145 : vector<1x8x32xf32>
    %cst_76 = arith.constant dense<0.000000e+00> : vector<1x8xf32>
    %147 = vector.multi_reduction <add>, %146, %cst_76 [2] : vector<1x8x32xf32> to vector<1x8xf32>
    %148 = vector.shape_cast %147 : vector<1x8xf32> to vector<1x8x1xf32>
    %cst_77 = arith.constant 3.200000e+01 : f32
    %149 = vector.broadcast %cst_77 : f32 to vector<1x8x1xf32>
    %150 = arith.divf %148, %149 : vector<1x8x1xf32>
    %cst_78 = arith.constant 9.99999974E-6 : f32
    %151 = vector.broadcast %cst_78 : f32 to vector<1x8x1xf32>
    %152 = arith.addf %150, %151 : vector<1x8x1xf32>
    %153 = math.rsqrt %152 : vector<1x8x1xf32>
    %154 = vector.broadcast %153 : vector<1x8x1xf32> to vector<1x8x32xf32>
    %155 = arith.mulf %145, %154 : vector<1x8x32xf32>
    %156 = vector.shape_cast %137 : vector<32xf32> to vector<1x1x32xf32>
    %157 = vector.broadcast %156 : vector<1x1x32xf32> to vector<1x8x32xf32>
    %158 = arith.mulf %155, %157 : vector<1x8x32xf32>
    %159 = vector.shape_cast %139 : vector<32xf32> to vector<1x1x32xf32>
    %160 = vector.broadcast %159 : vector<1x1x32xf32> to vector<1x8x32xf32>
    %161 = arith.addf %158, %160 : vector<1x8x32xf32>
    %c0_79 = arith.constant 0 : index
    %c0_80 = arith.constant 0 : index
    %c0_81 = arith.constant 0 : index
    %162 = vector.load %arg21[%c0_79, %c0_80, %c0_81] : memref<1x8x32xf32, #tpu.memory_space<vmem>>, vector<1x8x32xf32>
    tpu.vector_store %arg21[%c0_79, %c0_80, %c0_81], %161 {strides = array<i32>} : memref<1x8x32xf32, #tpu.memory_space<vmem>>, vector<1x8x32xf32>,
    %c1_i32 = arith.constant 1 : i32
    %163 = arith.cmpi eq, %arg1, %c1_i32 : i32
    %164 = arith.extui %163 : i1 to i32
    %c0_i32_82 = arith.constant 0 : i32
    %165 = arith.cmpi ne, %164, %c0_i32_82 : i32
    scf.if %165 {
      %c0_83 = arith.constant 0 : index
      %c0_84 = arith.constant 0 : index
      %c0_85 = arith.constant 0 : index
      %166 = vector.load %arg2[%c0_83, %c0_84, %c0_85] : memref<1x8x32xf32, #tpu.memory_space<vmem>>, vector<1x8x32xf32>
      %167 = arith.addf %166, %161 : vector<1x8x32xf32>
      %c0_86 = arith.constant 0 : index
      %c0_87 = arith.constant 0 : index
      %c0_88 = arith.constant 0 : index
      %168 = vector.load %arg20[%c0_86, %c0_87, %c0_88] : memref<1x8x32xf32, #tpu.memory_space<vmem>>, vector<1x8x32xf32>
      tpu.vector_store %arg20[%c0_86, %c0_87, %c0_88], %167 {strides = array<i32>} : memref<1x8x32xf32, #tpu.memory_space<vmem>>, vector<1x8x32xf32>,
    } else {
    }
    return
  }
  func.func @transform_0(%arg0: i32, %arg1: i32) -> (i32, i32, i32) {
    %c0_i32 = arith.constant 0 : i32
    %c0_i32_0 = arith.constant 0 : i32
    %c0_i32_1 = arith.constant 0 : i32
    return %arg0, %c0_i32, %c0_i32_0 : i32, i32, i32
  }
  func.func @transform_1(%arg0: i32, %arg1: i32) -> (i32, i32, i32) {
    %c0_i32 = arith.constant 0 : i32
    %c0_i32_0 = arith.constant 0 : i32
    %c0_i32_1 = arith.constant 0 : i32
    return %arg0, %c0_i32, %c0_i32_0 : i32, i32, i32
  }
  func.func @transform_2(%arg0: i32, %arg1: i32) -> (i32, i32, i32) {
    %c0_i32 = arith.constant 0 : i32
    %c0_i32_0 = arith.constant 0 : i32
    %c0_i32_1 = arith.constant 0 : i32
    return %arg1, %c0_i32, %c0_i32_0 : i32, i32, i32
  }
  func.func @transform_3(%arg0: i32, %arg1: i32) -> (i32, i32, i32) {
    %c0_i32 = arith.constant 0 : i32
    %c0_i32_0 = arith.constant 0 : i32
    %c0_i32_1 = arith.constant 0 : i32
    return %arg1, %c0_i32, %c0_i32_0 : i32, i32, i32
  }
  func.func @transform_4(%arg0: i32, %arg1: i32) -> (i32, i32, i32) {
    %c0_i32 = arith.constant 0 : i32
    %c0_i32_0 = arith.constant 0 : i32
    %c0_i32_1 = arith.constant 0 : i32
    return %arg1, %c0_i32, %c0_i32_0 : i32, i32, i32
  }
  func.func @transform_5(%arg0: i32, %arg1: i32) -> (i32, i32, i32) {
    %c0_i32 = arith.constant 0 : i32
    %c0_i32_0 = arith.constant 0 : i32
    %c0_i32_1 = arith.constant 0 : i32
    return %arg1, %c0_i32, %c0_i32_0 : i32, i32, i32
  }
  func.func @transform_6(%arg0: i32, %arg1: i32) -> (i32, i32, i32) {
    %c0_i32 = arith.constant 0 : i32
    %c0_i32_0 = arith.constant 0 : i32
    %c0_i32_1 = arith.constant 0 : i32
    return %arg1, %c0_i32, %c0_i32_0 : i32, i32, i32
  }
  func.func @transform_7(%arg0: i32, %arg1: i32) -> (i32, i32, i32) {
    %c0_i32 = arith.constant 0 : i32
    %c0_i32_0 = arith.constant 0 : i32
    %c0_i32_1 = arith.constant 0 : i32
    return %arg1, %c0_i32, %c0_i32_0 : i32, i32, i32
  }
  func.func @transform_8(%arg0: i32, %arg1: i32) -> (i32, i32, i32) {
    %c0_i32 = arith.constant 0 : i32
    %c0_i32_0 = arith.constant 0 : i32
    %c0_i32_1 = arith.constant 0 : i32
    return %arg1, %c0_i32, %c0_i32_0 : i32, i32, i32
  }
  func.func @transform_9(%arg0: i32, %arg1: i32) -> (i32, i32, i32) {
    %c0_i32 = arith.constant 0 : i32
    %c0_i32_0 = arith.constant 0 : i32
    %c0_i32_1 = arith.constant 0 : i32
    return %arg1, %c0_i32, %c0_i32_0 : i32, i32, i32
  }
  func.func @transform_10(%arg0: i32, %arg1: i32) -> (i32, i32, i32) {
    %c0_i32 = arith.constant 0 : i32
    %c0_i32_0 = arith.constant 0 : i32
    %c0_i32_1 = arith.constant 0 : i32
    return %arg1, %c0_i32, %c0_i32_0 : i32, i32, i32
  }
  func.func @transform_11(%arg0: i32, %arg1: i32) -> (i32, i32, i32) {
    %c0_i32 = arith.constant 0 : i32
    %c0_i32_0 = arith.constant 0 : i32
    %c0_i32_1 = arith.constant 0 : i32
    return %arg1, %c0_i32, %c0_i32_0 : i32, i32, i32
  }
  func.func @transform_12(%arg0: i32, %arg1: i32) -> (i32, i32, i32) {
    %c0_i32 = arith.constant 0 : i32
    %c0_i32_0 = arith.constant 0 : i32
    %c0_i32_1 = arith.constant 0 : i32
    return %arg1, %c0_i32, %c0_i32_0 : i32, i32, i32
  }
  func.func @transform_13(%arg0: i32, %arg1: i32) -> (i32, i32, i32) {
    %c0_i32 = arith.constant 0 : i32
    %c0_i32_0 = arith.constant 0 : i32
    %c0_i32_1 = arith.constant 0 : i32
    return %arg1, %c0_i32, %c0_i32_0 : i32, i32, i32
  }
  func.func @transform_14(%arg0: i32, %arg1: i32) -> (i32, i32, i32) {
    %c0_i32 = arith.constant 0 : i32
    %c0_i32_0 = arith.constant 0 : i32
    %c0_i32_1 = arith.constant 0 : i32
    return %arg1, %c0_i32, %c0_i32_0 : i32, i32, i32
  }
  func.func @transform_15(%arg0: i32, %arg1: i32) -> (i32, i32, i32) {
    %c0_i32 = arith.constant 0 : i32
    %c0_i32_0 = arith.constant 0 : i32
    %c0_i32_1 = arith.constant 0 : i32
    return %arg1, %c0_i32, %c0_i32_0 : i32, i32, i32
  }
  func.func @transform_16(%arg0: i32, %arg1: i32) -> (i32, i32, i32) {
    %c0_i32 = arith.constant 0 : i32
    %c0_i32_0 = arith.constant 0 : i32
    %c0_i32_1 = arith.constant 0 : i32
    return %arg1, %c0_i32, %c0_i32_0 : i32, i32, i32
  }
  func.func @transform_17(%arg0: i32, %arg1: i32) -> (i32, i32, i32) {
    %c0_i32 = arith.constant 0 : i32
    %c0_i32_0 = arith.constant 0 : i32
    %c0_i32_1 = arith.constant 0 : i32
    return %arg1, %c0_i32, %c0_i32_0 : i32, i32, i32
  }
  func.func @transform_18(%arg0: i32, %arg1: i32) -> (i32, i32, i32) {
    %c0_i32 = arith.constant 0 : i32
    %c0_i32_0 = arith.constant 0 : i32
    %c0_i32_1 = arith.constant 0 : i32
    return %arg0, %c0_i32, %c0_i32_0 : i32, i32, i32
  }
}

</mosaic_0001>

<llo_original>
// kernel: tpu_custom_call.1
$region0: #{tpu_custom_call.1}
  #allocation0 [shape = 'u32[]', space=smem, size = 0x4, offset = 0x4, fixed_abs, tag = 'smem constant byte address 0x4 - core index']
  #allocation1 [shape = 'u32[72,128]{1,0:T(1,128)}', space=vmem, size = 0x9000, scoped, tag = 'internal scratch']
  #allocation2 [shape = 'f32[1,8,32]{2,1,0:T(8,128)}', space=vmem, size = 0x1000, scoped, tag = 'scratch operand']
  #allocation3 [shape = 'bf16[8,32]{1,0:T(8,128)(2,1)}', space=vmem, size = 0x800, scoped, tag = 'scratch operand']
  %s0 = inlined_call_operand.hbm [shape: f32[2,8,32], index: 0, kind: input, shape index: {}]
  %s1 = inlined_call_operand.hbm [shape: f32[2,1,8], index: 1, kind: input, shape index: {}]
  %s2 = inlined_call_operand.vmem [shape: bf16[2,32,32], index: 2, kind: input, shape index: {}]
  %s3 = inlined_call_operand.vmem [shape: bf16[2,32,32], index: 3, kind: input, shape index: {}]
  %s4 = inlined_call_operand.vmem [shape: bf16[2,32,32], index: 4, kind: input, shape index: {}]
  %s5 = inlined_call_operand.vmem [shape: f32[2,1,32], index: 5, kind: input, shape index: {}]
  %s6 = inlined_call_operand.vmem [shape: f32[2,1,32], index: 6, kind: input, shape index: {}]
  %s7 = inlined_call_operand.hbm [shape: f32[2,1,32], index: 7, kind: input, shape index: {}]
  %s8 = inlined_call_operand.hbm [shape: bf16[2,32,32], index: 8, kind: input, shape index: {}]
  %s9 = inlined_call_operand.vmem [shape: f32[2,1,32], index: 9, kind: input, shape index: {}]
  %s10 = inlined_call_operand.vmem [shape: f32[2,1,32], index: 10, kind: input, shape index: {}]
  %s11 = inlined_call_operand.hbm [shape: f32[2,1,32], index: 11, kind: input, shape index: {}]
  %s12 = inlined_call_operand.vmem [shape: f32[2,1,32], index: 12, kind: input, shape index: {}]
  %s13 = inlined_call_operand.hbm [shape: f32[2,1,32], index: 13, kind: input, shape index: {}]
  %s14 = inlined_call_operand.hbm [shape: bf16[2,32,64], index: 14, kind: input, shape index: {}]
  %s15 = inlined_call_operand.vmem [shape: f32[2,1,64], index: 15, kind: input, shape index: {}]
  %s16 = inlined_call_operand.vmem [shape: bf16[2,64,32], index: 16, kind: input, shape index: {}]
  %s17 = inlined_call_operand.vmem [shape: f32[2,1,32], index: 17, kind: input, shape index: {}]
  %s18 = inlined_call_operand.hbm [shape: f32[2,8,32], index: 18, kind: output, shape index: {}]
  %s19 = sld [smem:[#allocation0]]
  $region141: #{tpu_custom_call.1} parent=0
    _
  %s21 = ssub.s32 1, %s19
  %s22 = scalar_select 0, %s21, %s19
  $region1: #{tpu_custom_call.1} parent=0
    #allocation4 [shape = 'u8[8192]{0}', space=vmem, size = 0x2000, scoped, tag = 'input window, operand 0']
    #allocation5 [shape = 's32[2]{0}', space=sflag, size = 0x8, scoped, tag = 'scoped memory for tpu_custom_call.1']
    #allocation6 [shape = 's32[2]{0}', space=sflag, size = 0x8, scoped, tag = 'scoped memory for tpu_custom_call.1']
    #allocation7 [shape = 'u8[1024]{0}', space=vmem, size = 0x400, scoped, tag = 'input window, operand 1']
    #allocation8 [shape = 's32[2]{0}', space=sflag, size = 0x8, scoped, tag = 'scoped memory for tpu_custom_call.1']
    #allocation9 [shape = 'u8[1024]{0}', space=vmem, size = 0x400, scoped, tag = 'input window, operand 7']
    #allocation10 [shape = 'u8[16384]{0}', space=vmem, size = 0x4000, scoped, tag = 'input window, operand 8']
    #allocation11 [shape = 's32[2]{0}', space=sflag, size = 0x8, scoped, tag = 'scoped memory for tpu_custom_call.1']
    #allocation12 [shape = 'u8[1024]{0}', space=vmem, size = 0x400, scoped, tag = 'input window, operand 11']
    #allocation13 [shape = 'u8[1024]{0}', space=vmem, size = 0x400, scoped, tag = 'input window, operand 13']
    #allocation14 [shape = 's32[2]{0}', space=sflag, size = 0x8, scoped, tag = 'scoped memory for tpu_custom_call.1']
    #allocation15 [shape = 'u8[16384]{0}', space=vmem, size = 0x4000, scoped, tag = 'input window, operand 14']
    #allocation16 [shape = 'u8[8192]{0}', space=vmem, size = 0x2000, scoped, tag = 'output window, operand 0']
    %23 = vsyncpa [#allocation5], 0
    %s24 = scalar_lea.sflag [#allocation5], 1
    %25 = vsyncpa %s24, 0
    %26 = vsyncpa [#allocation8], 0
    %s27 = scalar_lea.sflag [#allocation8], 1
    %28 = vsyncpa %s27, 0
    %29 = vsyncpa [#allocation11], 0
    %s30 = scalar_lea.sflag [#allocation11], 1
    %31 = vsyncpa %s30, 0
    %32 = vsyncpa [#allocation14], 0
    %s33 = scalar_lea.sflag [#allocation14], 1
    %34 = vsyncpa %s33, 0
    %35 = vsyncpa [#allocation6], 0
    %s36 = scalar_lea.sflag [#allocation6], 1
    %37 = vsyncpa %s36, 0
    loop: start=0, step=1, limit=6
    $region2: #{tpu_custom_call.1} parent=1 // loop_pre_header
      _
    $region3: #{tpu_custom_call.1} parent=1 // loop_header
      %s39 = sphi 0, %s43
      %p40 = scmp.ge.s32.totalorder %s39, 6
      %s46 = sphi 0, %s58
      %s47 = sphi 0, %s54
      %s48 = sphi 0, %s46
      %s49 = sphi 0, %s47
      %s50 = sphi 0, %s48
      %s51 = sphi 0, %s49
      %s61 = sphi 0, %s63
      %s64 = sphi 0, %s61
      %s65 = sphi 0, %s64
      %s81 = sphi 0, %s65
      %s87 = sphi 0, %s89
      %s90 = sphi 0, %s87
      %s91 = sphi 0, %s90
      %s107 = sphi 0, %s91
      %s113 = sphi 0, %s115
      %s116 = sphi 0, %s113
      %s117 = sphi 0, %s116
      %s133 = sphi 0, %s117
      %s139 = sphi 0, %s141
      %s142 = sphi 0, %s139
      %s143 = sphi 0, %s142
      %s159 = sphi 0, %s143
      %s165 = sphi 0, %s167
      %s168 = sphi 0, %s165
      %s169 = sphi 0, %s168
      %s185 = sphi 0, %s169
      %s191 = sphi 0, %s193
      %s194 = sphi 0, %s191
      %s195 = sphi 0, %s194
      %s211 = sphi 0, %s195
      %s217 = sphi 0, %s219
      %s220 = sphi 0, %s217
      %s221 = sphi 0, %s220
      %s237 = sphi 0, %s221
      %s243 = sphi 0, %s245
      %s246 = sphi 0, %s243
      %s247 = sphi 0, %s246
      %s263 = sphi 0, %s247
      %s269 = sphi 0, %s271
      %s272 = sphi 0, %s269
      %s273 = sphi 0, %s272
      %s289 = sphi 0, %s273
      %s295 = sphi 0, %s297
      %s298 = sphi 0, %s295
      %s299 = sphi 0, %s298
      %s315 = sphi 0, %s299
      %s321 = sphi 0, %s323
      %s324 = sphi 0, %s321
      %s325 = sphi 0, %s324
      %s341 = sphi 0, %s325
      %s347 = sphi 0, %s349
      %s350 = sphi 0, %s347
      %s351 = sphi 0, %s350
      %s367 = sphi 0, %s351
      %s373 = sphi 0, %s375
      %s376 = sphi 0, %s373
      %s377 = sphi 0, %s376
      %s393 = sphi 0, %s377
      %s399 = sphi 0, %s401
      %s402 = sphi 0, %s399
      %s403 = sphi 0, %s402
      %s419 = sphi 0, %s403
      %s425 = sphi 0, %s427
      %s428 = sphi 0, %s425
      %s429 = sphi 0, %s428
      %s445 = sphi 0, %s429
      %s451 = sphi 0, %s453
      %s454 = sphi 0, %s451
      %s455 = sphi 0, %s454
      %s471 = sphi 0, %s455
      %s477 = sphi 0, %s479
      %s480 = sphi 0, %s477
      %s481 = sphi 0, %s480
      %s497 = sphi 0, %s481
      %s503 = sphi 0, %s505
      %s506 = sphi 0, %s503
      %s507 = sphi 0, %s506
      %s523 = sphi 0, %s507
      %s529 = sphi 0, %s531
      %s532 = sphi 0, %s529
      %s533 = sphi 0, %s532
      %s549 = sphi 0, %s533
    $region4: #{tpu_custom_call.1} parent=1 // loop_header_branch
      %42 = sbr.rel (%p40) target = $region8
    $region5: #{tpu_custom_call.1} parent=1 // loop_body
      %s44 = ssub.s32 %s39, 1
      %s45 = ssub.s32 %s39, 2
      %s52 = sadd.s32 1, %s47
      %p53 = scmp.ge.s32.totalorder %s52, 2
      %s54 = scalar_select %p53, 0, %s52
      %s55 = sadd.s32 1, %s46
      %s56 = scalar_select %p53, %s55, %s46
      %p57 = scmp.ge.s32.totalorder %s56, 2
      %s58 = scalar_select %p57, 0, %s56
      %s59 = ssub.s32 %s46, %s58
      %p60 = scmp.eq.s32.totalorder %s59, 0
      %s62 = sadd.s32 %s61, 1
      %s63 = scalar_select %p60, %s61, %s62
      %p66 = pneg %p60
      %p67 = scmp.eq.s32.totalorder %s39, 3
      %p68 = por %p66, %p67
      %p69 = scmp.ne.s32.totalorder %s61, %s64
      %p70 = scmp.eq.s32.totalorder %s39, 0
      %p71 = por %p69, %p70
      %p72 = scmp.ne.s32.totalorder %s61, %s64
      %p73 = scmp.eq.s32.totalorder %s44, 3
      %p74 = por %p72, %p73
      %p75 = scmp.ne.s32.totalorder %s64, %s65
      %p76 = scmp.eq.s32.totalorder %s44, 0
      %p77 = por %p75, %p76
      %p78 = scmp.ne.s32.totalorder %s64, %s65
      %p79 = scmp.eq.s32.totalorder %s45, 3
      %p80 = por %p78, %p79
      %p82 = scmp.ne.s32.totalorder %s65, %s81
      %p83 = scmp.eq.s32.totalorder %s45, 0
      %p84 = por %p82, %p83
      %s85 = ssub.s32 %s46, %s58
      %p86 = scmp.eq.s32.totalorder %s85, 0
      %s88 = sadd.s32 %s87, 1
      %s89 = scalar_select %p86, %s87, %s88
      %p92 = pneg %p86
      %p93 = scmp.eq.s32.totalorder %s39, 3
      %p94 = por %p92, %p93
      %p95 = scmp.ne.s32.totalorder %s87, %s90
      %p96 = scmp.eq.s32.totalorder %s39, 0
      %p97 = por %p95, %p96
      %p98 = scmp.ne.s32.totalorder %s87, %s90
      %p99 = scmp.eq.s32.totalorder %s44, 3
      %p100 = por %p98, %p99
      %p101 = scmp.ne.s32.totalorder %s90, %s91
      %p102 = scmp.eq.s32.totalorder %s44, 0
      %p103 = por %p101, %p102
      %p104 = scmp.ne.s32.totalorder %s90, %s91
      %p105 = scmp.eq.s32.totalorder %s45, 3
      %p106 = por %p104, %p105
      %p108 = scmp.ne.s32.totalorder %s91, %s107
      %p109 = scmp.eq.s32.totalorder %s45, 0
      %p110 = por %p108, %p109
      %s111 = ssub.s32 %s47, %s54
      %p112 = scmp.eq.s32.totalorder %s111, 0
      %s114 = sadd.s32 %s113, 1
      %s115 = scalar_select %p112, %s113, %s114
      %p118 = pneg %p112
      %p119 = scmp.eq.s32.totalorder %s39, 3
      %p120 = por %p118, %p119
      %p121 = scmp.ne.s32.totalorder %s113, %s116
      %p122 = scmp.eq.s32.totalorder %s39, 0
      %p123 = por %p121, %p122
      %p124 = scmp.ne.s32.totalorder %s113, %s116
      %p125 = scmp.eq.s32.totalorder %s44, 3
      %p126 = por %p124, %p125
      %p127 = scmp.ne.s32.totalorder %s116, %s117
      %p128 = scmp.eq.s32.totalorder %s44, 0
      %p129 = por %p127, %p128
      %p130 = scmp.ne.s32.totalorder %s116, %s117
      %p131 = scmp.eq.s32.totalorder %s45, 3
      %p132 = por %p130, %p131
      %p134 = scmp.ne.s32.totalorder %s117, %s133
      %p135 = scmp.eq.s32.totalorder %s45, 0
      %p136 = por %p134, %p135
      %s137 = ssub.s32 %s47, %s54
      %p138 = scmp.eq.s32.totalorder %s137, 0
      %s140 = sadd.s32 %s139, 1
      %s141 = scalar_select %p138, %s139, %s140
      %p144 = pneg %p138
      %p145 = scmp.eq.s32.totalorder %s39, 3
      %p146 = por %p144, %p145
      %p147 = scmp.ne.s32.totalorder %s139, %s142
      %p148 = scmp.eq.s32.totalorder %s39, 0
      %p149 = por %p147, %p148
      %p150 = scmp.ne.s32.totalorder %s139, %s142
      %p151 = scmp.eq.s32.totalorder %s44, 3
      %p152 = por %p150, %p151
      %p153 = scmp.ne.s32.totalorder %s142, %s143
      %p154 = scmp.eq.s32.totalorder %s44, 0
      %p155 = por %p153, %p154
      %p156 = scmp.ne.s32.totalorder %s142, %s143
      %p157 = scmp.eq.s32.totalorder %s45, 3
      %p158 = por %p156, %p157
      %p160 = scmp.ne.s32.totalorder %s143, %s159
      %p161 = scmp.eq.s32.totalorder %s45, 0
      %p162 = por %p160, %p161
      %s163 = ssub.s32 %s47, %s54
      %p164 = scmp.eq.s32.totalorder %s163, 0
      %s166 = sadd.s32 %s165, 1
      %s167 = scalar_select %p164, %s165, %s166
      %p170 = pneg %p164
      %p171 = scmp.eq.s32.totalorder %s39, 3
      %p172 = por %p170, %p171
      %p173 = scmp.ne.s32.totalorder %s165, %s168
      %p174 = scmp.eq.s32.totalorder %s39, 0
      %p175 = por %p173, %p174
      %p176 = scmp.ne.s32.totalorder %s165, %s168
      %p177 = scmp.eq.s32.totalorder %s44, 3
      %p178 = por %p176, %p177
      %p179 = scmp.ne.s32.totalorder %s168, %s169
      %p180 = scmp.eq.s32.totalorder %s44, 0
      %p181 = por %p179, %p180
      %p182 = scmp.ne.s32.totalorder %s168, %s169
      %p183 = scmp.eq.s32.totalorder %s45, 3
      %p184 = por %p182, %p183
      %p186 = scmp.ne.s32.totalorder %s169, %s185
      %p187 = scmp.eq.s32.totalorder %s45, 0
      %p188 = por %p186, %p187
      %s189 = ssub.s32 %s47, %s54
      %p190 = scmp.eq.s32.totalorder %s189, 0
      %s192 = sadd.s32 %s191, 1
      %s193 = scalar_select %p190, %s191, %s192
      %p196 = pneg %p190
      %p197 = scmp.eq.s32.totalorder %s39, 3
      %p198 = por %p196, %p197
      %p199 = scmp.ne.s32.totalorder %s191, %s194
      %p200 = scmp.eq.s32.totalorder %s39, 0
      %p201 = por %p199, %p200
      %p202 = scmp.ne.s32.totalorder %s191, %s194
      %p203 = scmp.eq.s32.totalorder %s44, 3
      %p204 = por %p202, %p203
      %p205 = scmp.ne.s32.totalorder %s194, %s195
      %p206 = scmp.eq.s32.totalorder %s44, 0
      %p207 = por %p205, %p206
      %p208 = scmp.ne.s32.totalorder %s194, %s195
      %p209 = scmp.eq.s32.totalorder %s45, 3
      %p210 = por %p208, %p209
      %p212 = scmp.ne.s32.totalorder %s195, %s211
      %p213 = scmp.eq.s32.totalorder %s45, 0
      %p214 = por %p212, %p213
      %s215 = ssub.s32 %s47, %s54
      %p216 = scmp.eq.s32.totalorder %s215, 0
      %s218 = sadd.s32 %s217, 1
      %s219 = scalar_select %p216, %s217, %s218
      %p222 = pneg %p216
      %p223 = scmp.eq.s32.totalorder %s39, 3
      %p224 = por %p222, %p223
      %p225 = scmp.ne.s32.totalorder %s217, %s220
      %p226 = scmp.eq.s32.totalorder %s39, 0
      %p227 = por %p225, %p226
      %p228 = scmp.ne.s32.totalorder %s217, %s220
      %p229 = scmp.eq.s32.totalorder %s44, 3
      %p230 = por %p228, %p229
      %p231 = scmp.ne.s32.totalorder %s220, %s221
      %p232 = scmp.eq.s32.totalorder %s44, 0
      %p233 = por %p231, %p232
      %p234 = scmp.ne.s32.totalorder %s220, %s221
      %p235 = scmp.eq.s32.totalorder %s45, 3
      %p236 = por %p234, %p235
      %p238 = scmp.ne.s32.totalorder %s221, %s237
      %p239 = scmp.eq.s32.totalorder %s45, 0
      %p240 = por %p238, %p239
      %s241 = ssub.s32 %s47, %s54
      %p242 = scmp.eq.s32.totalorder %s241, 0
      %s244 = sadd.s32 %s243, 1
      %s245 = scalar_select %p242, %s243, %s244
      %p248 = pneg %p242
      %p249 = scmp.eq.s32.totalorder %s39, 3
      %p250 = por %p248, %p249
      %p251 = scmp.ne.s32.totalorder %s243, %s246
      %p252 = scmp.eq.s32.totalorder %s39, 0
      %p253 = por %p251, %p252
      %p254 = scmp.ne.s32.totalorder %s243, %s246
      %p255 = scmp.eq.s32.totalorder %s44, 3
      %p256 = por %p254, %p255
      %p257 = scmp.ne.s32.totalorder %s246, %s247
      %p258 = scmp.eq.s32.totalorder %s44, 0
      %p259 = por %p257, %p258
      %p260 = scmp.ne.s32.totalorder %s246, %s247
      %p261 = scmp.eq.s32.totalorder %s45, 3
      %p262 = por %p260, %p261
      %p264 = scmp.ne.s32.totalorder %s247, %s263
      %p265 = scmp.eq.s32.totalorder %s45, 0
      %p266 = por %p264, %p265
      %s267 = ssub.s32 %s47, %s54
      %p268 = scmp.eq.s32.totalorder %s267, 0
      %s270 = sadd.s32 %s269, 1
      %s271 = scalar_select %p268, %s269, %s270
      %p274 = pneg %p268
      %p275 = scmp.eq.s32.totalorder %s39, 3
      %p276 = por %p274, %p275
      %p277 = scmp.ne.s32.totalorder %s269, %s272
      %p278 = scmp.eq.s32.totalorder %s39, 0
      %p279 = por %p277, %p278
      %p280 = scmp.ne.s32.totalorder %s269, %s272
      %p281 = scmp.eq.s32.totalorder %s44, 3
      %p282 = por %p280, %p281
      %p283 = scmp.ne.s32.totalorder %s272, %s273
      %p284 = scmp.eq.s32.totalorder %s44, 0
      %p285 = por %p283, %p284
      %p286 = scmp.ne.s32.totalorder %s272, %s273
      %p287 = scmp.eq.s32.totalorder %s45, 3
      %p288 = por %p286, %p287
      %p290 = scmp.ne.s32.totalorder %s273, %s289
      %p291 = scmp.eq.s32.totalorder %s45, 0
      %p292 = por %p290, %p291
      %s293 = ssub.s32 %s47, %s54
      %p294 = scmp.eq.s32.totalorder %s293, 0
      %s296 = sadd.s32 %s295, 1
      %s297 = scalar_select %p294, %s295, %s296
      %p300 = pneg %p294
      %p301 = scmp.eq.s32.totalorder %s39, 3
      %p302 = por %p300, %p301
      %p303 = scmp.ne.s32.totalorder %s295, %s298
      %p304 = scmp.eq.s32.totalorder %s39, 0
      %p305 = por %p303, %p304
      %p306 = scmp.ne.s32.totalorder %s295, %s298
      %p307 = scmp.eq.s32.totalorder %s44, 3
      %p308 = por %p306, %p307
      %p309 = scmp.ne.s32.totalorder %s298, %s299
      %p310 = scmp.eq.s32.totalorder %s44, 0
      %p311 = por %p309, %p310
      %p312 = scmp.ne.s32.totalorder %s298, %s299
      %p313 = scmp.eq.s32.totalorder %s45, 3
      %p314 = por %p312, %p313
      %p316 = scmp.ne.s32.totalorder %s299, %s315
      %p317 = scmp.eq.s32.totalorder %s45, 0
      %p318 = por %p316, %p317
      %s319 = ssub.s32 %s47, %s54
      %p320 = scmp.eq.s32.totalorder %s319, 0
      %s322 = sadd.s32 %s321, 1
      %s323 = scalar_select %p320, %s321, %s322
      %p326 = pneg %p320
      %p327 = scmp.eq.s32.totalorder %s39, 3
      %p328 = por %p326, %p327
      %p329 = scmp.ne.s32.totalorder %s321, %s324
      %p330 = scmp.eq.s32.totalorder %s39, 0
      %p331 = por %p329, %p330
      %p332 = scmp.ne.s32.totalorder %s321, %s324
      %p333 = scmp.eq.s32.totalorder %s44, 3
      %p334 = por %p332, %p333
      %p335 = scmp.ne.s32.totalorder %s324, %s325
      %p336 = scmp.eq.s32.totalorder %s44, 0
      %p337 = por %p335, %p336
      %p338 = scmp.ne.s32.totalorder %s324, %s325
      %p339 = scmp.eq.s32.totalorder %s45, 3
      %p340 = por %p338, %p339
      %p342 = scmp.ne.s32.totalorder %s325, %s341
      %p343 = scmp.eq.s32.totalorder %s45, 0
      %p344 = por %p342, %p343
      %s345 = ssub.s32 %s47, %s54
      %p346 = scmp.eq.s32.totalorder %s345, 0
      %s348 = sadd.s32 %s347, 1
      %s349 = scalar_select %p346, %s347, %s348
      %p352 = pneg %p346
      %p353 = scmp.eq.s32.totalorder %s39, 3
      %p354 = por %p352, %p353
      %p355 = scmp.ne.s32.totalorder %s347, %s350
      %p356 = scmp.eq.s32.totalorder %s39, 0
      %p357 = por %p355, %p356
      %p358 = scmp.ne.s32.totalorder %s347, %s350
      %p359 = scmp.eq.s32.totalorder %s44, 3
      %p360 = por %p358, %p359
      %p361 = scmp.ne.s32.totalorder %s350, %s351
      %p362 = scmp.eq.s32.totalorder %s44, 0
      %p363 = por %p361, %p362
      %p364 = scmp.ne.s32.totalorder %s350, %s351
      %p365 = scmp.eq.s32.totalorder %s45, 3
      %p366 = por %p364, %p365
      %p368 = scmp.ne.s32.totalorder %s351, %s367
      %p369 = scmp.eq.s32.totalorder %s45, 0
      %p370 = por %p368, %p369
      %s371 = ssub.s32 %s47, %s54
      %p372 = scmp.eq.s32.totalorder %s371, 0
      %s374 = sadd.s32 %s373, 1
      %s375 = scalar_select %p372, %s373, %s374
      %p378 = pneg %p372
      %p379 = scmp.eq.s32.totalorder %s39, 3
      %p380 = por %p378, %p379
      %p381 = scmp.ne.s32.totalorder %s373, %s376
      %p382 = scmp.eq.s32.totalorder %s39, 0
      %p383 = por %p381, %p382
      %p384 = scmp.ne.s32.totalorder %s373, %s376
      %p385 = scmp.eq.s32.totalorder %s44, 3
      %p386 = por %p384, %p385
      %p387 = scmp.ne.s32.totalorder %s376, %s377
      %p388 = scmp.eq.s32.totalorder %s44, 0
      %p389 = por %p387, %p388
      %p390 = scmp.ne.s32.totalorder %s376, %s377
      %p391 = scmp.eq.s32.totalorder %s45, 3
      %p392 = por %p390, %p391
      %p394 = scmp.ne.s32.totalorder %s377, %s393
      %p395 = scmp.eq.s32.totalorder %s45, 0
      %p396 = por %p394, %p395
      %s397 = ssub.s32 %s47, %s54
      %p398 = scmp.eq.s32.totalorder %s397, 0
      %s400 = sadd.s32 %s399, 1
      %s401 = scalar_select %p398, %s399, %s400
      %p404 = pneg %p398
      %p405 = scmp.eq.s32.totalorder %s39, 3
      %p406 = por %p404, %p405
      %p407 = scmp.ne.s32.totalorder %s399, %s402
      %p408 = scmp.eq.s32.totalorder %s39, 0
      %p409 = por %p407, %p408
      %p410 = scmp.ne.s32.totalorder %s399, %s402
      %p411 = scmp.eq.s32.totalorder %s44, 3
      %p412 = por %p410, %p411
      %p413 = scmp.ne.s32.totalorder %s402, %s403
      %p414 = scmp.eq.s32.totalorder %s44, 0
      %p415 = por %p413, %p414
      %p416 = scmp.ne.s32.totalorder %s402, %s403
      %p417 = scmp.eq.s32.totalorder %s45, 3
      %p418 = por %p416, %p417
      %p420 = scmp.ne.s32.totalorder %s403, %s419
      %p421 = scmp.eq.s32.totalorder %s45, 0
      %p422 = por %p420, %p421
      %s423 = ssub.s32 %s47, %s54
      %p424 = scmp.eq.s32.totalorder %s423, 0
      %s426 = sadd.s32 %s425, 1
      %s427 = scalar_select %p424, %s425, %s426
      %p430 = pneg %p424
      %p431 = scmp.eq.s32.totalorder %s39, 3
      %p432 = por %p430, %p431
      %p433 = scmp.ne.s32.totalorder %s425, %s428
      %p434 = scmp.eq.s32.totalorder %s39, 0
      %p435 = por %p433, %p434
      %p436 = scmp.ne.s32.totalorder %s425, %s428
      %p437 = scmp.eq.s32.totalorder %s44, 3
      %p438 = por %p436, %p437
      %p439 = scmp.ne.s32.totalorder %s428, %s429
      %p440 = scmp.eq.s32.totalorder %s44, 0
      %p441 = por %p439, %p440
      %p442 = scmp.ne.s32.totalorder %s428, %s429
      %p443 = scmp.eq.s32.totalorder %s45, 3
      %p444 = por %p442, %p443
      %p446 = scmp.ne.s32.totalorder %s429, %s445
      %p447 = scmp.eq.s32.totalorder %s45, 0
      %p448 = por %p446, %p447
      %s449 = ssub.s32 %s47, %s54
      %p450 = scmp.eq.s32.totalorder %s449, 0
      %s452 = sadd.s32 %s451, 1
      %s453 = scalar_select %p450, %s451, %s452
      %p456 = pneg %p450
      %p457 = scmp.eq.s32.totalorder %s39, 3
      %p458 = por %p456, %p457
      %p459 = scmp.ne.s32.totalorder %s451, %s454
      %p460 = scmp.eq.s32.totalorder %s39, 0
      %p461 = por %p459, %p460
      %p462 = scmp.ne.s32.totalorder %s451, %s454
      %p463 = scmp.eq.s32.totalorder %s44, 3
      %p464 = por %p462, %p463
      %p465 = scmp.ne.s32.totalorder %s454, %s455
      %p466 = scmp.eq.s32.totalorder %s44, 0
      %p467 = por %p465, %p466
      %p468 = scmp.ne.s32.totalorder %s454, %s455
      %p469 = scmp.eq.s32.totalorder %s45, 3
      %p470 = por %p468, %p469
      %p472 = scmp.ne.s32.totalorder %s455, %s471
      %p473 = scmp.eq.s32.totalorder %s45, 0
      %p474 = por %p472, %p473
      %s475 = ssub.s32 %s47, %s54
      %p476 = scmp.eq.s32.totalorder %s475, 0
      %s478 = sadd.s32 %s477, 1
      %s479 = scalar_select %p476, %s477, %s478
      %p482 = pneg %p476
      %p483 = scmp.eq.s32.totalorder %s39, 3
      %p484 = por %p482, %p483
      %p485 = scmp.ne.s32.totalorder %s477, %s480
      %p486 = scmp.eq.s32.totalorder %s39, 0
      %p487 = por %p485, %p486
      %p488 = scmp.ne.s32.totalorder %s477, %s480
      %p489 = scmp.eq.s32.totalorder %s44, 3
      %p490 = por %p488, %p489
      %p491 = scmp.ne.s32.totalorder %s480, %s481
      %p492 = scmp.eq.s32.totalorder %s44, 0
      %p493 = por %p491, %p492
      %p494 = scmp.ne.s32.totalorder %s480, %s481
      %p495 = scmp.eq.s32.totalorder %s45, 3
      %p496 = por %p494, %p495
      %p498 = scmp.ne.s32.totalorder %s481, %s497
      %p499 = scmp.eq.s32.totalorder %s45, 0
      %p500 = por %p498, %p499
      %s501 = ssub.s32 %s47, %s54
      %p502 = scmp.eq.s32.totalorder %s501, 0
      %s504 = sadd.s32 %s503, 1
      %s505 = scalar_select %p502, %s503, %s504
      %p508 = pneg %p502
      %p509 = scmp.eq.s32.totalorder %s39, 3
      %p510 = por %p508, %p509
      %p511 = scmp.ne.s32.totalorder %s503, %s506
      %p512 = scmp.eq.s32.totalorder %s39, 0
      %p513 = por %p511, %p512
      %p514 = scmp.ne.s32.totalorder %s503, %s506
      %p515 = scmp.eq.s32.totalorder %s44, 3
      %p516 = por %p514, %p515
      %p517 = scmp.ne.s32.totalorder %s506, %s507
      %p518 = scmp.eq.s32.totalorder %s44, 0
      %p519 = por %p517, %p518
      %p520 = scmp.ne.s32.totalorder %s506, %s507
      %p521 = scmp.eq.s32.totalorder %s45, 3
      %p522 = por %p520, %p521
      %p524 = scmp.ne.s32.totalorder %s507, %s523
      %p525 = scmp.eq.s32.totalorder %s45, 0
      %p526 = por %p524, %p525
      %s527 = ssub.s32 %s46, %s58
      %p528 = scmp.eq.s32.totalorder %s527, 0
      %s530 = sadd.s32 %s529, 1
      %s531 = scalar_select %p528, %s529, %s530
      %p534 = pneg %p528
      %p535 = scmp.eq.s32.totalorder %s39, 3
      %p536 = por %p534, %p535
      %p537 = scmp.ne.s32.totalorder %s529, %s532
      %p538 = scmp.eq.s32.totalorder %s39, 0
      %p539 = por %p537, %p538
      %p540 = scmp.ne.s32.totalorder %s529, %s532
      %p541 = scmp.eq.s32.totalorder %s44, 3
      %p542 = por %p540, %p541
      %p543 = scmp.ne.s32.totalorder %s532, %s533
      %p544 = scmp.eq.s32.totalorder %s44, 0
      %p545 = por %p543, %p544
      %p546 = scmp.ne.s32.totalorder %s532, %s533
      %p547 = scmp.eq.s32.totalorder %s45, 3
      %p548 = por %p546, %p547
      %p550 = scmp.ne.s32.totalorder %s533, %s549
      %p551 = scmp.eq.s32.totalorder %s45, 0
      %p552 = por %p550, %p551
      %p553 = scmp.le.s32.totalorder 1, %s39
      %p554 = scmp.lt.s32.totalorder %s39, 5
      %p555 = pnand %p553, %p554
      %p556 = pneg %p555
      // Predicated region
      $region9: #{tpu_custom_call.1} parent=5 // pred_check
        _
      $region10: #{tpu_custom_call.1} parent=5 // pred_check_branch
        %558 = sbr.rel (%p555) target = $region12
      $region11: #{tpu_custom_call.1} parent=5 // pred_region
        %s559 = ssub.s32 %s39, 1
      $region12: #{tpu_custom_call.1} parent=5 // pred_fallthru
        _
      %p560 = scmp.lt.s32.totalorder %s39, 4
      // Predicated region
      $region13: #{tpu_custom_call.1} parent=5 // pred_check
        %p561 = pneg %p560
      $region14: #{tpu_custom_call.1} parent=5 // pred_check_branch
        %563 = sbr.rel (%p561) target = $region16
      $region15: #{tpu_custom_call.1} parent=5 // pred_region
        // Predicated region
        $region17: #{tpu_custom_call.1} parent=15 // pred_check
          %p564 = pneg %p71
        $region18: #{tpu_custom_call.1} parent=15 // pred_check_branch
          %566 = sbr.rel (%p564) target = $region20
        $region19: #{tpu_custom_call.1} parent=15 // pred_region
          %s567 = sand.u32 %s61, 1
          %s568 = scalar_lea.sflag [#allocation5], %s567
          %s569 = sand.u32 %s61, 1
          %s570 = smul.addr %s569, 8
          %s571 = scalar_lea.vmem [#allocation4], %s570
          %573 = vsyncadd %s568, 0
          %s574 = smul.addr %s46, 8
          %s575 = scalar_lea.hbm %s0, %s574
          %s577 = sshll.u32 %s575, 4
          %s578 = int_to_ptr.hbm [resolvable:$true] %s577
          %s579 = sshll.u32 %s571, 4
          %s580 = int_to_ptr.vmem [resolvable:$true] %s579
          %582 = dma.hbm_to_vmem [thread:$0]  %s578, 128, %s580, %s568
        $region20: #{tpu_custom_call.1} parent=15 // pred_fallthru
          _
        // Predicated region
        $region21: #{tpu_custom_call.1} parent=15 // pred_check
          %p583 = pneg %p97
        $region22: #{tpu_custom_call.1} parent=15 // pred_check_branch
          %585 = sbr.rel (%p583) target = $region24
        $region23: #{tpu_custom_call.1} parent=15 // pred_region
          %s586 = sand.u32 %s39, 1
          %s587 = scalar_lea.sflag [#allocation8], %s586
          %s588 = sand.u32 %s87, 1
          %s589 = scalar_lea.vmem [#allocation7], %s588
          %591 = vsyncadd %s587, 0
          %s592 = scalar_lea.hbm %s1, %s46
          %s594 = sshll.u32 %s592, 4
          %s595 = int_to_ptr.hbm [resolvable:$true] %s594
          %s596 = sshll.u32 %s589, 4
          %s597 = int_to_ptr.vmem [resolvable:$true] %s596
          %599 = dma.hbm_to_vmem [thread:$0]  %s595, 16, %s597, %s587
        $region24: #{tpu_custom_call.1} parent=15 // pred_fallthru
          _
        // Predicated region
        $region25: #{tpu_custom_call.1} parent=15 // pred_check
          %p600 = pneg %p123
        $region26: #{tpu_custom_call.1} parent=15 // pred_check_branch
          %602 = sbr.rel (%p600) target = $region28
        $region27: #{tpu_custom_call.1} parent=15 // pred_region
          %p603 = scmp.lt.s32.totalorder %s47, 1
          %s604 = scalar_select %p603, %s47, 1
          %s605 = smul.addr %s604, 4
          %s606 = smul.addr %s605, 4
          %s607 = scalar_lea.vmem %s2, %s606
        $region28: #{tpu_custom_call.1} parent=15 // pred_fallthru
          _
        // Predicated region
        $region29: #{tpu_custom_call.1} parent=15 // pred_check
          %p608 = pneg %p149
        $region30: #{tpu_custom_call.1} parent=15 // pred_check_branch
          %610 = sbr.rel (%p608) target = $region32
        $region31: #{tpu_custom_call.1} parent=15 // pred_region
          %p611 = scmp.lt.s32.totalorder %s47, 1
          %s612 = scalar_select %p611, %s47, 1
          %s613 = smul.addr %s612, 4
          %s614 = smul.addr %s613, 4
          %s615 = scalar_lea.vmem %s3, %s614
        $region32: #{tpu_custom_call.1} parent=15 // pred_fallthru
          _
        // Predicated region
        $region33: #{tpu_custom_call.1} parent=15 // pred_check
          %p616 = pneg %p175
        $region34: #{tpu_custom_call.1} parent=15 // pred_check_branch
          %618 = sbr.rel (%p616) target = $region36
        $region35: #{tpu_custom_call.1} parent=15 // pred_region
          %p619 = scmp.lt.s32.totalorder %s47, 1
          %s620 = scalar_select %p619, %s47, 1
          %s621 = smul.addr %s620, 4
          %s622 = smul.addr %s621, 4
          %s623 = scalar_lea.vmem %s4, %s622
        $region36: #{tpu_custom_call.1} parent=15 // pred_fallthru
          _
        // Predicated region
        $region37: #{tpu_custom_call.1} parent=15 // pred_check
          %p624 = pneg %p201
        $region38: #{tpu_custom_call.1} parent=15 // pred_check_branch
          %626 = sbr.rel (%p624) target = $region40
        $region39: #{tpu_custom_call.1} parent=15 // pred_region
          %p627 = scmp.lt.s32.totalorder %s47, 1
          %s628 = scalar_select %p627, %s47, 1
          %s629 = scalar_lea.vmem %s5, %s628
        $region40: #{tpu_custom_call.1} parent=15 // pred_fallthru
          _
        // Predicated region
        $region41: #{tpu_custom_call.1} parent=15 // pred_check
          %p630 = pneg %p227
        $region42: #{tpu_custom_call.1} parent=15 // pred_check_branch
          %632 = sbr.rel (%p630) target = $region44
        $region43: #{tpu_custom_call.1} parent=15 // pred_region
          %p633 = scmp.lt.s32.totalorder %s47, 1
          %s634 = scalar_select %p633, %s47, 1
          %s635 = scalar_lea.vmem %s6, %s634
        $region44: #{tpu_custom_call.1} parent=15 // pred_fallthru
          _
        // Predicated region
        $region45: #{tpu_custom_call.1} parent=15 // pred_check
          %p636 = pneg %p253
        $region46: #{tpu_custom_call.1} parent=15 // pred_check_branch
          %638 = sbr.rel (%p636) target = $region48
        $region47: #{tpu_custom_call.1} parent=15 // pred_region
          %s639 = sand.u32 %s39, 1
          %s640 = scalar_lea.sflag [#allocation8], %s639
          %s641 = sand.u32 %s243, 1
          %s642 = scalar_lea.vmem [#allocation9], %s641
          %644 = vsyncadd %s640, 0
          %s645 = scalar_lea.hbm %s7, %s47
          %s647 = sshll.u32 %s645, 4
          %s648 = int_to_ptr.hbm [resolvable:$true] %s647
          %s649 = sshll.u32 %s642, 4
          %s650 = int_to_ptr.vmem [resolvable:$true] %s649
          %652 = dma.hbm_to_vmem [thread:$0]  %s648, 16, %s650, %s640
        $region48: #{tpu_custom_call.1} parent=15 // pred_fallthru
          _
        // Predicated region
        $region49: #{tpu_custom_call.1} parent=15 // pred_check
          %p653 = pneg %p279
        $region50: #{tpu_custom_call.1} parent=15 // pred_check_branch
          %655 = sbr.rel (%p653) target = $region52
        $region51: #{tpu_custom_call.1} parent=15 // pred_region
          %s656 = sand.u32 %s39, 1
          %s657 = scalar_lea.sflag [#allocation11], %s656
          %s658 = sand.u32 %s269, 1
          %s659 = smul.addr %s658, 16
          %s660 = scalar_lea.vmem [#allocation10], %s659
          %662 = vsyncadd %s657, 0
          %s663 = smul.addr %s47, 4
          %s664 = smul.addr %s663, 4
          %s665 = scalar_lea.hbm %s8, %s664
          %s666 = sshll.u32 %s665, 4
          %s667 = int_to_ptr.hbm [resolvable:$true] %s666
          %s668 = sshll.u32 %s660, 4
          %s669 = int_to_ptr.vmem [resolvable:$true] %s668
          %674 = dma.hbm_to_vmem [thread:$0]  %s667, 256, %s669, %s657, 64, 64, 4
        $region52: #{tpu_custom_call.1} parent=15 // pred_fallthru
          _
        // Predicated region
        $region53: #{tpu_custom_call.1} parent=15 // pred_check
          %p675 = pneg %p305
        $region54: #{tpu_custom_call.1} parent=15 // pred_check_branch
          %677 = sbr.rel (%p675) target = $region56
        $region55: #{tpu_custom_call.1} parent=15 // pred_region
          %p678 = scmp.lt.s32.totalorder %s47, 1
          %s679 = scalar_select %p678, %s47, 1
          %s680 = scalar_lea.vmem %s9, %s679
        $region56: #{tpu_custom_call.1} parent=15 // pred_fallthru
          _
        // Predicated region
        $region57: #{tpu_custom_call.1} parent=15 // pred_check
          %p681 = pneg %p331
        $region58: #{tpu_custom_call.1} parent=15 // pred_check_branch
          %683 = sbr.rel (%p681) target = $region60
        $region59: #{tpu_custom_call.1} parent=15 // pred_region
          %p684 = scmp.lt.s32.totalorder %s47, 1
          %s685 = scalar_select %p684, %s47, 1
          %s686 = scalar_lea.vmem %s10, %s685
        $region60: #{tpu_custom_call.1} parent=15 // pred_fallthru
          _
        // Predicated region
        $region61: #{tpu_custom_call.1} parent=15 // pred_check
          %p687 = pneg %p357
        $region62: #{tpu_custom_call.1} parent=15 // pred_check_branch
          %689 = sbr.rel (%p687) target = $region64
        $region63: #{tpu_custom_call.1} parent=15 // pred_region
          %s690 = sand.u32 %s39, 1
          %s691 = scalar_lea.sflag [#allocation11], %s690
          %s692 = sand.u32 %s347, 1
          %s693 = scalar_lea.vmem [#allocation12], %s692
          %695 = vsyncadd %s691, 0
          %s696 = scalar_lea.hbm %s11, %s47
          %s698 = sshll.u32 %s696, 4
          %s699 = int_to_ptr.hbm [resolvable:$true] %s698
          %s700 = sshll.u32 %s693, 4
          %s701 = int_to_ptr.vmem [resolvable:$true] %s700
          %703 = dma.hbm_to_vmem [thread:$0]  %s699, 16, %s701, %s691
        $region64: #{tpu_custom_call.1} parent=15 // pred_fallthru
          _
        // Predicated region
        $region65: #{tpu_custom_call.1} parent=15 // pred_check
          %p704 = pneg %p383
        $region66: #{tpu_custom_call.1} parent=15 // pred_check_branch
          %706 = sbr.rel (%p704) target = $region68
        $region67: #{tpu_custom_call.1} parent=15 // pred_region
          %p707 = scmp.lt.s32.totalorder %s47, 1
          %s708 = scalar_select %p707, %s47, 1
          %s709 = scalar_lea.vmem %s12, %s708
        $region68: #{tpu_custom_call.1} parent=15 // pred_fallthru
          _
        // Predicated region
        $region69: #{tpu_custom_call.1} parent=15 // pred_check
          %p710 = pneg %p409
        $region70: #{tpu_custom_call.1} parent=15 // pred_check_branch
          %712 = sbr.rel (%p710) target = $region72
        $region71: #{tpu_custom_call.1} parent=15 // pred_region
          %s713 = sand.u32 %s39, 1
          %s714 = scalar_lea.sflag [#allocation14], %s713
          %s715 = sand.u32 %s399, 1
          %s716 = scalar_lea.vmem [#allocation13], %s715
          %718 = vsyncadd %s714, 0
          %s719 = scalar_lea.hbm %s13, %s47
          %s721 = sshll.u32 %s719, 4
          %s722 = int_to_ptr.hbm [resolvable:$true] %s721
          %s723 = sshll.u32 %s716, 4
          %s724 = int_to_ptr.vmem [resolvable:$true] %s723
          %726 = dma.hbm_to_vmem [thread:$0]  %s722, 16, %s724, %s714
        $region72: #{tpu_custom_call.1} parent=15 // pred_fallthru
          _
        // Predicated region
        $region73: #{tpu_custom_call.1} parent=15 // pred_check
          %p727 = pneg %p435
        $region74: #{tpu_custom_call.1} parent=15 // pred_check_branch
          %729 = sbr.rel (%p727) target = $region76
        $region75: #{tpu_custom_call.1} parent=15 // pred_region
          %s730 = sand.u32 %s39, 1
          %s731 = scalar_lea.sflag [#allocation14], %s730
          %s732 = sand.u32 %s425, 1
          %s733 = smul.addr %s732, 16
          %s734 = scalar_lea.vmem [#allocation15], %s733
          %736 = vsyncadd %s731, 0
          %s737 = smul.addr %s47, 4
          %s738 = smul.addr %s737, 4
          %s739 = scalar_lea.hbm %s14, %s738
          %s740 = sshll.u32 %s739, 4
          %s741 = int_to_ptr.hbm [resolvable:$true] %s740
          %s742 = sshll.u32 %s734, 4
          %s743 = int_to_ptr.vmem [resolvable:$true] %s742
          %748 = dma.hbm_to_vmem [thread:$0]  %s741, 256, %s743, %s731, 64, 64, 4
        $region76: #{tpu_custom_call.1} parent=15 // pred_fallthru
          _
        // Predicated region
        $region77: #{tpu_custom_call.1} parent=15 // pred_check
          %p749 = pneg %p461
        $region78: #{tpu_custom_call.1} parent=15 // pred_check_branch
          %751 = sbr.rel (%p749) target = $region80
        $region79: #{tpu_custom_call.1} parent=15 // pred_region
          %p752 = scmp.lt.s32.totalorder %s47, 1
          %s753 = scalar_select %p752, %s47, 1
          %s754 = scalar_lea.vmem %s15, %s753
        $region80: #{tpu_custom_call.1} parent=15 // pred_fallthru
          _
        // Predicated region
        $region81: #{tpu_custom_call.1} parent=15 // pred_check
          %p755 = pneg %p487
        $region82: #{tpu_custom_call.1} parent=15 // pred_check_branch
          %757 = sbr.rel (%p755) target = $region84
        $region83: #{tpu_custom_call.1} parent=15 // pred_region
          %p758 = scmp.lt.s32.totalorder %s47, 1
          %s759 = scalar_select %p758, %s47, 1
          %s760 = smul.addr %s759, 8
          %s761 = smul.addr %s760, 4
          %s762 = scalar_lea.vmem %s16, %s761
        $region84: #{tpu_custom_call.1} parent=15 // pred_fallthru
          _
        // Predicated region
        $region85: #{tpu_custom_call.1} parent=15 // pred_check
          %p763 = pneg %p513
        $region86: #{tpu_custom_call.1} parent=15 // pred_check_branch
          %765 = sbr.rel (%p763) target = $region88
        $region87: #{tpu_custom_call.1} parent=15 // pred_region
          %p766 = scmp.lt.s32.totalorder %s47, 1
          %s767 = scalar_select %p766, %s47, 1
          %s768 = scalar_lea.vmem %s17, %s767
        $region88: #{tpu_custom_call.1} parent=15 // pred_fallthru
          _
      $region16: #{tpu_custom_call.1} parent=5 // pred_fallthru
        _
      %p769 = scmp.le.s32.totalorder 1, %s39
      %p770 = scmp.lt.s32.totalorder %s39, 5
      %p771 = pnand %p769, %p770
      %p772 = pneg %p771
      // Predicated region
      $region89: #{tpu_custom_call.1} parent=5 // pred_check
        _
      $region90: #{tpu_custom_call.1} parent=5 // pred_check_branch
        %774 = sbr.rel (%p771) target = $region92
      $region91: #{tpu_custom_call.1} parent=5 // pred_region
        %s775 = ssub.s32 %s39, 1
        %s776 = sand.u32 %s64, 1
        %s777 = scalar_lea.sflag [#allocation5], %s776
        %s778 = sand.u32 %s64, 1
        %s779 = smul.addr %s778, 8
        %s780 = scalar_lea.vmem [#allocation4], %s779
        // Predicated region
        $region93: #{tpu_custom_call.1} parent=91 // pred_check
          %p781 = pneg %p77
        $region94: #{tpu_custom_call.1} parent=91 // pred_check_branch
          %783 = sbr.rel (%p781) target = $region96
        $region95: #{tpu_custom_call.1} parent=91 // pred_region
          %785 = dma.done %s777, 128
        $region96: #{tpu_custom_call.1} parent=91 // pred_fallthru
          _
        %s786 = sand.u32 %s44, 1
        %s787 = scalar_lea.sflag [#allocation8], %s786
        %s788 = sand.u32 %s90, 1
        %s789 = scalar_lea.vmem [#allocation7], %s788
        // Predicated region
        $region97: #{tpu_custom_call.1} parent=91 // pred_check
          %p790 = pneg %p103
        $region98: #{tpu_custom_call.1} parent=91 // pred_check_branch
          %792 = sbr.rel (%p790) target = $region100
        $region99: #{tpu_custom_call.1} parent=91 // pred_region
          %794 = dma.done %s787, 16
        $region100: #{tpu_custom_call.1} parent=91 // pred_fallthru
          _
        %s795 = sand.u32 %s44, 1
        %s796 = scalar_lea.sflag [#allocation8], %s795
        %s797 = sand.u32 %s246, 1
        %s798 = scalar_lea.vmem [#allocation9], %s797
        // Predicated region
        $region101: #{tpu_custom_call.1} parent=91 // pred_check
          %p799 = pneg %p259
        $region102: #{tpu_custom_call.1} parent=91 // pred_check_branch
          %801 = sbr.rel (%p799) target = $region104
        $region103: #{tpu_custom_call.1} parent=91 // pred_region
          %803 = dma.done %s796, 16
        $region104: #{tpu_custom_call.1} parent=91 // pred_fallthru
          _
        %s804 = sand.u32 %s44, 1
        %s805 = scalar_lea.sflag [#allocation11], %s804
        %s806 = sand.u32 %s272, 1
        %s807 = smul.addr %s806, 16
        %s808 = scalar_lea.vmem [#allocation10], %s807
        // Predicated region
        $region105: #{tpu_custom_call.1} parent=91 // pred_check
          %p809 = pneg %p285
        $region106: #{tpu_custom_call.1} parent=91 // pred_check_branch
          %811 = sbr.rel (%p809) target = $region108
        $region107: #{tpu_custom_call.1} parent=91 // pred_region
          %813 = dma.done %s805, 256
        $region108: #{tpu_custom_call.1} parent=91 // pred_fallthru
          _
        %s814 = sand.u32 %s44, 1
        %s815 = scalar_lea.sflag [#allocation11], %s814
        %s816 = sand.u32 %s350, 1
        %s817 = scalar_lea.vmem [#allocation12], %s816
        // Predicated region
        $region109: #{tpu_custom_call.1} parent=91 // pred_check
          %p818 = pneg %p363
        $region110: #{tpu_custom_call.1} parent=91 // pred_check_branch
          %820 = sbr.rel (%p818) target = $region112
        $region111: #{tpu_custom_call.1} parent=91 // pred_region
          %822 = dma.done %s815, 16
        $region112: #{tpu_custom_call.1} parent=91 // pred_fallthru
          _
        %s823 = sand.u32 %s44, 1
        %s824 = scalar_lea.sflag [#allocation14], %s823
        %s825 = sand.u32 %s402, 1
        %s826 = scalar_lea.vmem [#allocation13], %s825
        // Predicated region
        $region113: #{tpu_custom_call.1} parent=91 // pred_check
          %p827 = pneg %p415
        $region114: #{tpu_custom_call.1} parent=91 // pred_check_branch
          %829 = sbr.rel (%p827) target = $region116
        $region115: #{tpu_custom_call.1} parent=91 // pred_region
          %831 = dma.done %s824, 16
        $region116: #{tpu_custom_call.1} parent=91 // pred_fallthru
          _
        %s832 = sand.u32 %s44, 1
        %s833 = scalar_lea.sflag [#allocation14], %s832
        %s834 = sand.u32 %s428, 1
        %s835 = smul.addr %s834, 16
        %s836 = scalar_lea.vmem [#allocation15], %s835
        // Predicated region
        $region117: #{tpu_custom_call.1} parent=91 // pred_check
          %p837 = pneg %p441
        $region118: #{tpu_custom_call.1} parent=91 // pred_check_branch
          %839 = sbr.rel (%p837) target = $region120
        $region119: #{tpu_custom_call.1} parent=91 // pred_region
          %841 = dma.done %s833, 256
        $region120: #{tpu_custom_call.1} parent=91 // pred_fallthru
          _
        %s842 = sand.u32 %s64, 1
        %s843 = scalar_lea.sflag [#allocation5], %s842
        %s844 = sand.u32 %s64, 1
        %s845 = smul.addr %s844, 8
        %s846 = scalar_lea.vmem [#allocation4], %s845
        %p847 = pneg %p77
        %p848 = pneg %p74
        %s849 = sand.u32 %s44, 1
        %s850 = scalar_lea.sflag [#allocation8], %s849
        %s851 = sand.u32 %s90, 1
        %s852 = scalar_lea.vmem [#allocation7], %s851
        %p853 = pneg %p103
        %p854 = pneg %p100
        %p855 = scmp.lt.s32.totalorder %s49, 1
        %s856 = scalar_select %p855, %s49, 1
        %s857 = smul.addr %s856, 4
        %s858 = smul.addr %s857, 4
        %s859 = scalar_lea.vmem %s2, %s858
        %p860 = pneg %p129
        %p861 = pneg %p126
        %p862 = scmp.lt.s32.totalorder %s49, 1
        %s863 = scalar_select %p862, %s49, 1
        %s864 = smul.addr %s863, 4
        %s865 = smul.addr %s864, 4
        %s866 = scalar_lea.vmem %s3, %s865
        %p867 = pneg %p155
        %p868 = pneg %p152
        %p869 = scmp.lt.s32.totalorder %s49, 1
        %s870 = scalar_select %p869, %s49, 1
        %s871 = smul.addr %s870, 4
        %s872 = smul.addr %s871, 4
        %s873 = scalar_lea.vmem %s4, %s872
        %p874 = pneg %p181
        %p875 = pneg %p178
        %p876 = scmp.lt.s32.totalorder %s49, 1
        %s877 = scalar_select %p876, %s49, 1
        %s878 = scalar_lea.vmem %s5, %s877
        %p879 = pneg %p207
        %p880 = pneg %p204
        %p881 = scmp.lt.s32.totalorder %s49, 1
        %s882 = scalar_select %p881, %s49, 1
        %s883 = scalar_lea.vmem %s6, %s882
        %p884 = pneg %p233
        %p885 = pneg %p230
        %s886 = sand.u32 %s44, 1
        %s887 = scalar_lea.sflag [#allocation8], %s886
        %s888 = sand.u32 %s246, 1
        %s889 = scalar_lea.vmem [#allocation9], %s888
        %p890 = pneg %p259
        %p891 = pneg %p256
        %s892 = sand.u32 %s44, 1
        %s893 = scalar_lea.sflag [#allocation11], %s892
        %s894 = sand.u32 %s272, 1
        %s895 = smul.addr %s894, 16
        %s896 = scalar_lea.vmem [#allocation10], %s895
        %p897 = pneg %p285
        %p898 = pneg %p282
        %p899 = scmp.lt.s32.totalorder %s49, 1
        %s900 = scalar_select %p899, %s49, 1
        %s901 = scalar_lea.vmem %s9, %s900
        %p902 = pneg %p311
        %p903 = pneg %p308
        %p904 = scmp.lt.s32.totalorder %s49, 1
        %s905 = scalar_select %p904, %s49, 1
        %s906 = scalar_lea.vmem %s10, %s905
        %p907 = pneg %p337
        %p908 = pneg %p334
        %s909 = sand.u32 %s44, 1
        %s910 = scalar_lea.sflag [#allocation11], %s909
        %s911 = sand.u32 %s350, 1
        %s912 = scalar_lea.vmem [#allocation12], %s911
        %p913 = pneg %p363
        %p914 = pneg %p360
        %p915 = scmp.lt.s32.totalorder %s49, 1
        %s916 = scalar_select %p915, %s49, 1
        %s917 = scalar_lea.vmem %s12, %s916
        %p918 = pneg %p389
        %p919 = pneg %p386
        %s920 = sand.u32 %s44, 1
        %s921 = scalar_lea.sflag [#allocation14], %s920
        %s922 = sand.u32 %s402, 1
        %s923 = scalar_lea.vmem [#allocation13], %s922
        %p924 = pneg %p415
        %p925 = pneg %p412
        %s926 = sand.u32 %s44, 1
        %s927 = scalar_lea.sflag [#allocation14], %s926
        %s928 = sand.u32 %s428, 1
        %s929 = smul.addr %s928, 16
        %s930 = scalar_lea.vmem [#allocation15], %s929
        %p931 = pneg %p441
        %p932 = pneg %p438
        %p933 = scmp.lt.s32.totalorder %s49, 1
        %s934 = scalar_select %p933, %s49, 1
        %s935 = scalar_lea.vmem %s15, %s934
        %p936 = pneg %p467
        %p937 = pneg %p464
        %p938 = scmp.lt.s32.totalorder %s49, 1
        %s939 = scalar_select %p938, %s49, 1
        %s940 = smul.addr %s939, 8
        %s941 = smul.addr %s940, 4
        %s942 = scalar_lea.vmem %s16, %s941
        %p943 = pneg %p493
        %p944 = pneg %p490
        %p945 = scmp.lt.s32.totalorder %s49, 1
        %s946 = scalar_select %p945, %s49, 1
        %s947 = scalar_lea.vmem %s17, %s946
        %p948 = pneg %p519
        %p949 = pneg %p516
        %p950 = pneg %p545
        %p951 = pneg %p542
        %s952 = sand.u32 %s532, 1
        %s953 = scalar_lea.sflag [#allocation6], %s952
        %s954 = sand.u32 %s532, 1
        %s955 = smul.addr %s954, 8
        %s956 = scalar_lea.vmem [#allocation16], %s955
        %p957 = scmp.lt.s32.totalorder %s49, 1
        %s958 = scalar_select %p957, %s49, 1
        %s959 = smul.addr %s958, 4
        %s960 = smul.addr %s959, 4
        %s961 = scalar_lea.vmem %s2, %s960
        %p962 = scmp.lt.s32.totalorder %s49, 1
        %s963 = scalar_select %p962, %s49, 1
        %s964 = smul.addr %s963, 4
        %s965 = smul.addr %s964, 4
        %s966 = scalar_lea.vmem %s3, %s965
        %p967 = scmp.lt.s32.totalorder %s49, 1
        %s968 = scalar_select %p967, %s49, 1
        %s969 = smul.addr %s968, 4
        %s970 = smul.addr %s969, 4
        %s971 = scalar_lea.vmem %s4, %s970
        %p972 = scmp.lt.s32.totalorder %s49, 1
        %s973 = scalar_select %p972, %s49, 1
        %s974 = scalar_lea.vmem %s5, %s973
        %p975 = scmp.lt.s32.totalorder %s49, 1
        %s976 = scalar_select %p975, %s49, 1
        %s977 = scalar_lea.vmem %s6, %s976
        %p978 = scmp.lt.s32.totalorder %s49, 1
        %s979 = scalar_select %p978, %s49, 1
        %s980 = scalar_lea.vmem %s9, %s979
        %p981 = scmp.lt.s32.totalorder %s49, 1
        %s982 = scalar_select %p981, %s49, 1
        %s983 = scalar_lea.vmem %s10, %s982
        %p984 = scmp.lt.s32.totalorder %s49, 1
        %s985 = scalar_select %p984, %s49, 1
        %s986 = scalar_lea.vmem %s12, %s985
        %p987 = scmp.lt.s32.totalorder %s49, 1
        %s988 = scalar_select %p987, %s49, 1
        %s989 = scalar_lea.vmem %s15, %s988
        %p990 = scmp.lt.s32.totalorder %s49, 1
        %s991 = scalar_select %p990, %s49, 1
        %s992 = smul.addr %s991, 8
        %s993 = smul.addr %s992, 4
        %s994 = scalar_lea.vmem %s16, %s993
        %p995 = scmp.lt.s32.totalorder %s49, 1
        %s996 = scalar_select %p995, %s49, 1
        %s997 = scalar_lea.vmem %s17, %s996
        %p999 = scmp.eq.s32.totalorder %s49, 0
        // Predicated region
        $region121: #{tpu_custom_call.1} parent=91 // pred_check
          %p1000 = pneg %p999
        $region122: #{tpu_custom_call.1} parent=91 // pred_check_branch
          %1002 = sbr.rel (%p1000) target = $region124
        $region123: #{tpu_custom_call.1} parent=91 // pred_region
          %v1003 = vld [vmem:[%s780] sm:$0xff]
          %vm1004 = vcmask 261120
          %1005 = vst.msk [vmem:[#allocation2] sm:$0xff] %vm1004, %v1003
        $region124: #{tpu_custom_call.1} parent=91 // pred_fallthru
          _
        %v1006 = vld [vmem:[#allocation2] sm:$0xff]
        %v1007 = vpack.c.bf16 %v1006, %v1006
        %v1008 = vld [vmem:[%s961] sm:$0xf]
        %v1009 = vld [vmem:[%s961 + $0x4] sm:$0xf]
        %v1010 = vld [vmem:[%s961 + $0x8] sm:$0xf]
        %v1011 = vld [vmem:[%s961 + $0xc] sm:$0xf]
        %v1012 = vld [vmem:[%s974] sm:$0x1]
        %v1014 = vperm.slane %v1012, 0
        %v1020 = vunpack.c.l.b16 %v1008
        %v1021 = vunpack.c.l.b16 %v1009
        %v1022 = vunpack.c.l.b16 %v1010
        %v1023 = vunpack.c.l.b16 %v1011
        %v1024 = vpack.c.b16 %v1021, %v1020
        %v1025 = vpack.c.b16 %v1023, %v1022
        %vm1028 = vcmask 261120
        %v1030 = vsel %vm1028, %v1007, 0
        %1032 = vmatpush.bf16.msra.mxu0 0
        %1033 = vmatpush.bf16.msra.mxu0 0
        %1034 = vmatpush.bf16.msra.mxu0 0
        %1035 = vmatpush.bf16.msra.mxu0 0
        %1036 = vmatpush.bf16.msra.mxu0 0
        %1037 = vmatpush.bf16.msra.mxu0 0
        %1038 = vmatpush.bf16.msra.mxu0 %v1025
        %1039 = vmatpush.bf16.msra.mxu0 %v1024
        %1040 = vmatmul.bf16.gmra.mxu0 %v1030
        %v1041 = vpop.f32.mrf.mxu0
        %v1042 = vadd.f32 %v1014, %v1041
        %v1043 = vpop.f32.mrf.mxu0
        %1044 = vdwg.mxu0
        %v1045 = vld [vmem:[%s966] sm:$0xf]
        %v1046 = vld [vmem:[%s966 + $0x4] sm:$0xf]
        %v1047 = vld [vmem:[%s966 + $0x8] sm:$0xf]
        %v1048 = vld [vmem:[%s966 + $0xc] sm:$0xf]
        %v1049 = vld [vmem:[%s977] sm:$0x1]
        %v1051 = vperm.slane %v1049, 0
        %v1057 = vunpack.c.l.b16 %v1045
        %v1058 = vunpack.c.l.b16 %v1046
        %v1059 = vunpack.c.l.b16 %v1047
        %v1060 = vunpack.c.l.b16 %v1048
        %v1061 = vpack.c.b16 %v1058, %v1057
        %v1062 = vpack.c.b16 %v1060, %v1059
        %1065 = vmatpush.bf16.msra.mxu0 0
        %1066 = vmatpush.bf16.msra.mxu0 0
        %1067 = vmatpush.bf16.msra.mxu0 0
        %1068 = vmatpush.bf16.msra.mxu0 0
        %1069 = vmatpush.bf16.msra.mxu0 0
        %1070 = vmatpush.bf16.msra.mxu0 0
        %1071 = vmatpush.bf16.msra.mxu0 %v1062
        %1072 = vmatpush.bf16.msra.mxu0 %v1061
        %1073 = vmatmul.bf16.gmra.mxu0 %v1030
        %v1074 = vpop.f32.mrf.mxu0
        %v1075 = vadd.f32 %v1051, %v1074
        %v1076 = vpop.f32.mrf.mxu0
        %1077 = vdwg.mxu0
        %v1078 = vld [vmem:[%s971] sm:$0xf]
        %v1079 = vld [vmem:[%s971 + $0x4] sm:$0xf]
        %v1080 = vld [vmem:[%s971 + $0x8] sm:$0xf]
        %v1081 = vld [vmem:[%s971 + $0xc] sm:$0xf]
        %v1082 = vld [vmem:[%s798] sm:$0x1]
        %v1084 = vperm.slane %v1082, 0
        %v1090 = vunpack.c.l.b16 %v1078
        %v1091 = vunpack.c.l.b16 %v1079
        %v1092 = vunpack.c.l.b16 %v1080
        %v1093 = vunpack.c.l.b16 %v1081
        %v1094 = vpack.c.b16 %v1091, %v1090
        %v1095 = vpack.c.b16 %v1093, %v1092
        %1098 = vmatpush.bf16.msra.mxu0 0
        %1099 = vmatpush.bf16.msra.mxu0 0
        %1100 = vmatpush.bf16.msra.mxu0 0
        %1101 = vmatpush.bf16.msra.mxu0 0
        %1102 = vmatpush.bf16.msra.mxu0 0
        %1103 = vmatpush.bf16.msra.mxu0 0
        %1104 = vmatpush.bf16.msra.mxu0 %v1095
        %1105 = vmatpush.bf16.msra.mxu0 %v1094
        %1106 = vmatmul.bf16.gmra.mxu0 %v1030
        %v1107 = vpop.f32.mrf.mxu0
        %v1108 = vadd.f32 %v1084, %v1107
        %v1109 = vpop.f32.mrf.mxu0
        %1110 = vdwg.mxu0
        %1112 = vrot.lane.b32.xlu0 %v1042, 112
        %v1113 = vpop.permute.xlu0 %1112
        %v1115 = vpack.c.bf16 %v1042, %v1042
        %v1116 = vpack.c.bf16 %v1113, %v1113
        %1118 = vrot.lane.b32.xlu0 %v1075, 112
        %v1119 = vpop.permute.xlu0 %1118
        %v1121 = vpack.c.bf16 %v1075, %v1075
        %v1122 = vpack.c.bf16 %v1119, %v1119
        %1124 = vrot.lane.b32.xlu0 %v1108, 112
        %v1125 = vpop.permute.xlu0 %1124
        %v1127 = vpack.c.bf16 %v1108, %v1108
        %v1128 = vpack.c.bf16 %v1125, %v1125
        %v1129 = vld [vmem:[%s789] sm:$0x1]
        %v1131 = vperm.slane %v1129, 0
        %vm1133 = vcmask 130048
        %v1135 = vsel %vm1133, %v1115, 0
        %v1138 = vsel %vm1133, %v1121, 0
        %1140 = vmatpush.bf16.xpose.msra.mxu0 0
        %1141 = vmatpush.bf16.xpose.msra.mxu0 0
        %1142 = vmatpush.bf16.xpose.msra.mxu0 0
        %1143 = vmatpush.bf16.xpose.msra.mxu0 0
        %1144 = vmatpush.bf16.xpose.msra.mxu0 0
        %1145 = vmatpush.bf16.xpose.msra.mxu0 0
        %1146 = vmatpush.bf16.xpose.msra.mxu0 0
        %1147 = vmatpush.bf16.xpose.msra.mxu0 %v1138
        %1148 = vmatmul.bf16.gmra.mxu0 %v1135
        %v1149 = vpop.f32.mrf.mxu0
        %v1150 = vadd.f32 %v1131, %v1149
        %v1151 = vpop.f32.mrf.mxu0
        %1152 = vdwg.mxu0
        %v1154 = vsel %vm1133, %v1116, 0
        %v1157 = vsel %vm1133, %v1122, 0
        %1159 = vmatpush.bf16.xpose.msra.mxu0 0
        %1160 = vmatpush.bf16.xpose.msra.mxu0 0
        %1161 = vmatpush.bf16.xpose.msra.mxu0 0
        %1162 = vmatpush.bf16.xpose.msra.mxu0 0
        %1163 = vmatpush.bf16.xpose.msra.mxu0 0
        %1164 = vmatpush.bf16.xpose.msra.mxu0 0
        %1165 = vmatpush.bf16.xpose.msra.mxu0 0
        %1166 = vmatpush.bf16.xpose.msra.mxu0 %v1157
        %1167 = vmatmul.bf16.gmra.mxu0 %v1154
        %v1168 = vpop.f32.mrf.mxu0
        %v1169 = vadd.f32 %v1131, %v1168
        %v1170 = vpop.f32.mrf.mxu0
        %1171 = vdwg.mxu0
        %vm1172 = vcmask 64512
        %v1173 = vsel %vm1172, %v1150, -inf
        %1174 = vmax.xlane.f32.xlu0 %v1173
        %v1175 = vpop.xlane.xlu0 %1174
        %v1176 = vsel %vm1172, %v1169, -inf
        %1177 = vmax.xlane.f32.xlu0 %v1176
        %v1178 = vpop.xlane.xlu0 %1177
        %v1179 = vsub.f32 %v1150, %v1175
        %v1180 = vsub.f32 %v1169, %v1178
        %v1181 = vmul.f32 %v1179, 1.442695
        %v1182 = vpow.pop %v1181
        %v1183 = vmul.f32 %v1180, 1.442695
        %v1184 = vpow.pop %v1183
        %v1185 = vsel %vm1172, %v1182, 0.0
        %1186 = vadd.xlane.f32.xlu0 %v1185
        %v1187 = vpop.xlane.xlu0 %1186
        %v1188 = vsel %vm1172, %v1184, 0.0
        %1189 = vadd.xlane.f32.xlu0 %v1188
        %v1190 = vpop.xlane.xlu0 %1189
        %v1191 = vrcp.pop %v1187
        %v1192 = vrcp.pop %v1190
        %v1193 = vmul.f32 %v1182, %v1191
        %v1194 = vmul.f32 %v1184, %v1192
        %v1195 = vpack.c.bf16 %v1193, %v1193
        %v1196 = vpack.c.bf16 %v1194, %v1194
        %v1198 = vsel %vm1172, %v1195, 0
        %vm1200 = vcmask 1043456
        %v1202 = vsel %vm1200, %v1127, 0
        %1204 = vmatpush.bf16.msra.mxu0 0
        %1205 = vmatpush.bf16.msra.mxu0 0
        %1206 = vmatpush.bf16.msra.mxu0 0
        %1207 = vmatpush.bf16.msra.mxu0 0
        %1208 = vmatpush.bf16.msra.mxu0 0
        %1209 = vmatpush.bf16.msra.mxu0 0
        %1210 = vmatpush.bf16.msra.mxu0 0
        %1211 = vmatpush.bf16.msra.mxu0 %v1202
        %1212 = vmatmul.bf16.gmra.mxu0 %v1198
        %v1213 = vpop.f32.mrf.mxu0
        %v1214 = vadd.f32 0.0, %v1213
        %v1215 = vpop.f32.mrf.mxu0
        %1216 = vdwg.mxu0
        %v1218 = vsel %vm1172, %v1196, 0
        %v1221 = vsel %vm1200, %v1128, 0
        %1223 = vmatpush.bf16.msra.mxu0 0
        %1224 = vmatpush.bf16.msra.mxu0 0
        %1225 = vmatpush.bf16.msra.mxu0 0
        %1226 = vmatpush.bf16.msra.mxu0 0
        %1227 = vmatpush.bf16.msra.mxu0 0
        %1228 = vmatpush.bf16.msra.mxu0 0
        %1229 = vmatpush.bf16.msra.mxu0 0
        %1230 = vmatpush.bf16.msra.mxu0 %v1221
        %1231 = vmatmul.bf16.gmra.mxu0 %v1218
        %v1232 = vpop.f32.mrf.mxu0
        %v1233 = vadd.f32 0.0, %v1232
        %v1234 = vpop.f32.mrf.mxu0
        %1235 = vdwg.mxu0
        %v1236 = vpack.c.bf16 %v1214, %v1214
        %vm1237 = vcmask 125952
        %1238 = vst.msk [vmem:[#allocation3] sm:$0xf] %vm1237, %v1236
        %v1239 = vpack.c.bf16 %v1233, %v1233
        %1241 = vrot.lane.b32.xlu0 %v1239, 16
        %v1242 = vpop.permute.xlu0 %1241
        %vm1244 = vcmask 257152
        %1245 = vst.msk [vmem:[#allocation3] sm:$0xf] %vm1244, %v1242
        %v1246 = vld [vmem:[#allocation3] sm:$0xf]
        %v1247 = vld [vmem:[%s808] sm:$0xf]
        %v1248 = vld [vmem:[%s808 + $0x4] sm:$0xf]
        %v1249 = vld [vmem:[%s808 + $0x8] sm:$0xf]
        %v1250 = vld [vmem:[%s808 + $0xc] sm:$0xf]
        %v1251 = vld [vmem:[%s980] sm:$0x1]
        %v1253 = vperm.slane %v1251, 0
        %v1259 = vunpack.c.l.b16 %v1247
        %v1260 = vunpack.c.l.b16 %v1248
        %v1261 = vunpack.c.l.b16 %v1249
        %v1262 = vunpack.c.l.b16 %v1250
        %v1263 = vpack.c.b16 %v1260, %v1259
        %v1264 = vpack.c.b16 %v1262, %v1261
        %v1268 = vsel %vm1028, %v1246, 0
        %1270 = vmatpush.bf16.msra.mxu0 0
        %1271 = vmatpush.bf16.msra.mxu0 0
        %1272 = vmatpush.bf16.msra.mxu0 0
        %1273 = vmatpush.bf16.msra.mxu0 0
        %1274 = vmatpush.bf16.msra.mxu0 0
        %1275 = vmatpush.bf16.msra.mxu0 0
        %1276 = vmatpush.bf16.msra.mxu0 %v1264
        %1277 = vmatpush.bf16.msra.mxu0 %v1263
        %1278 = vmatmul.bf16.gmra.mxu0 %v1268
        %v1279 = vpop.f32.mrf.mxu0
        %v1280 = vadd.f32 %v1253, %v1279
        %v1281 = vpop.f32.mrf.mxu0
        %1282 = vdwg.mxu0
        %v1283 = vadd.f32 %v1006, %v1280
        %v1284 = vld [vmem:[%s983] sm:$0x1]
        %v1285 = vld [vmem:[%s817] sm:$0x1]
        %v1286 = vsel %vm1028, %v1283, 0.0
        %1287 = vadd.xlane.f32.xlu0 %v1286
        %v1288 = vpop.xlane.xlu0 %1287
        %v1289 = vrcp.pop 32.0
        %v1290 = vmul.f32 32.0, %v1289
        %v1291 = vsub.f32 1.0, %v1290
        %v1292 = vmul.f32 %v1289, %v1291
        %v1293 = vadd.f32 %v1289, %v1292
        %vm1294 = vweird.f32 %v1289
        %v1295 = vsel %vm1294, %v1289, %v1293
        %v1296 = vmul.f32 %v1288, %v1295
        %v1297 = vsub.f32 %v1283, %v1296
        %v1298 = vmul.f32 %v1297, %v1297
        %v1299 = vsel %vm1028, %v1298, 0.0
        %1300 = vadd.xlane.f32.xlu0 %v1299
        %v1301 = vpop.xlane.xlu0 %1300
        %v1302 = vmul.f32 %v1301, %v1295
        %v1303 = vadd.f32 %v1302, 1e-05
        %v1304 = vrsqrt.pop %v1303
        %v1305 = vmul.f32 %v1304, %v1303
        %v1306 = vmul.f32 %v1305, %v1304
        %v1307 = vmul.f32 0.5, %v1306
        %v1308 = vsub.f32 1.5, %v1307
        %v1309 = vmul.f32 %v1304, %v1308
        %vm1310 = vweird.f32 %v1303
        %vm1311 = vweird.f32 %v1304
        %vm1312 = vmor %vm1310, %vm1311
        %v1313 = vsel %vm1312, %v1304, %v1309
        %v1314 = vmul.f32 %v1297, %v1313
        %v1316 = vperm.slane %v1284, 0
        %v1318 = vmul.f32 %v1314, %v1316
        %v1320 = vperm.slane %v1285, 0
        %v1322 = vadd.f32 %v1318, %v1320
        %v1323 = vpack.c.bf16 %v1322, %v1322
        %v1324 = vld [vmem:[%s836] sm:$0xf]
        %v1325 = vld [vmem:[%s836 + $0x4] sm:$0xf]
        %v1326 = vld [vmem:[%s836 + $0x8] sm:$0xf]
        %v1327 = vld [vmem:[%s836 + $0xc] sm:$0xf]
        %v1328 = vld [vmem:[%s989] sm:$0x1]
        %v1330 = vperm.slane %v1328, 0
        %v1336 = vunpack.c.l.b16 %v1324
        %v1337 = vunpack.c.l.b16 %v1325
        %v1338 = vunpack.c.l.b16 %v1326
        %v1339 = vunpack.c.l.b16 %v1327
        %v1340 = vpack.c.b16 %v1337, %v1336
        %v1341 = vpack.c.b16 %v1339, %v1338
        %v1345 = vsel %vm1028, %v1323, 0
        %1347 = vmatpush.bf16.msra.mxu0 0
        %1348 = vmatpush.bf16.msra.mxu0 0
        %1349 = vmatpush.bf16.msra.mxu0 0
        %1350 = vmatpush.bf16.msra.mxu0 0
        %1351 = vmatpush.bf16.msra.mxu0 0
        %1352 = vmatpush.bf16.msra.mxu0 0
        %1353 = vmatpush.bf16.msra.mxu0 %v1341
        %1354 = vmatpush.bf16.msra.mxu0 %v1340
        %1355 = vmatmul.bf16.gmra.mxu0 %v1345
        %v1356 = vpop.f32.mrf.mxu0
        %v1357 = vadd.f32 %v1330, %v1356
        %v1358 = vpop.f32.mrf.mxu0
        %1359 = vdwg.mxu0
        %v1360 = vmax.f32 %v1357, 0.0
        %v1361 = vpack.c.bf16 %v1360, %v1360
        %v1362 = vld [vmem:[%s994] sm:$0xf]
        %v1363 = vld [vmem:[%s994 + $0x4] sm:$0xf]
        %v1364 = vld [vmem:[%s994 + $0x8] sm:$0xf]
        %v1365 = vld [vmem:[%s994 + $0xc] sm:$0xf]
        %v1366 = vld [vmem:[%s994 + $0x10] sm:$0xf]
        %v1367 = vld [vmem:[%s994 + $0x14] sm:$0xf]
        %v1368 = vld [vmem:[%s994 + $0x18] sm:$0xf]
        %v1369 = vld [vmem:[%s994 + $0x1c] sm:$0xf]
        %v1370 = vld [vmem:[%s997] sm:$0x1]
        %v1372 = vperm.slane %v1370, 0
        %v1382 = vunpack.c.l.b16 %v1362
        %v1383 = vunpack.c.l.b16 %v1363
        %v1384 = vunpack.c.l.b16 %v1364
        %v1385 = vunpack.c.l.b16 %v1365
        %v1386 = vunpack.c.l.b16 %v1366
        %v1387 = vunpack.c.l.b16 %v1367
        %v1388 = vunpack.c.l.b16 %v1368
        %v1389 = vunpack.c.l.b16 %v1369
        %v1390 = vpack.c.b16 %v1383, %v1382
        %v1391 = vpack.c.b16 %v1385, %v1384
        %v1392 = vpack.c.b16 %v1387, %v1386
        %v1393 = vpack.c.b16 %v1389, %v1388
        %vm1398 = vcmask 523264
        %v1400 = vsel %vm1398, %v1361, 0
        %1402 = vmatpush.bf16.msra.mxu0 0
        %1403 = vmatpush.bf16.msra.mxu0 0
        %1404 = vmatpush.bf16.msra.mxu0 0
        %1405 = vmatpush.bf16.msra.mxu0 0
        %1406 = vmatpush.bf16.msra.mxu0 %v1393
        %1407 = vmatpush.bf16.msra.mxu0 %v1392
        %1408 = vmatpush.bf16.msra.mxu0 %v1391
        %1409 = vmatpush.bf16.msra.mxu0 %v1390
        %1410 = vmatmul.bf16.gmra.mxu0 %v1400
        %v1411 = vpop.f32.mrf.mxu0
        %v1412 = vadd.f32 %v1372, %v1411
        %v1413 = vpop.f32.mrf.mxu0
        %1414 = vdwg.mxu0
        %v1415 = vadd.f32 %v1322, %v1412
        %v1416 = vld [vmem:[%s986] sm:$0x1]
        %v1417 = vld [vmem:[%s826] sm:$0x1]
        %v1418 = vsel %vm1028, %v1415, 0.0
        %1419 = vadd.xlane.f32.xlu0 %v1418
        %v1420 = vpop.xlane.xlu0 %1419
        %v1421 = vmul.f32 %v1420, %v1295
        %v1422 = vsub.f32 %v1415, %v1421
        %v1423 = vmul.f32 %v1422, %v1422
        %v1424 = vsel %vm1028, %v1423, 0.0
        %1425 = vadd.xlane.f32.xlu0 %v1424
        %v1426 = vpop.xlane.xlu0 %1425
        %v1427 = vmul.f32 %v1426, %v1295
        %v1428 = vadd.f32 %v1427, 1e-05
        %v1429 = vrsqrt.pop %v1428
        %v1430 = vmul.f32 %v1429, %v1428
        %v1431 = vmul.f32 %v1430, %v1429
        %v1432 = vmul.f32 0.5, %v1431
        %v1433 = vsub.f32 1.5, %v1432
        %v1434 = vmul.f32 %v1429, %v1433
        %vm1435 = vweird.f32 %v1428
        %vm1436 = vweird.f32 %v1429
        %vm1437 = vmor %vm1435, %vm1436
        %v1438 = vsel %vm1437, %v1429, %v1434
        %v1439 = vmul.f32 %v1422, %v1438
        %v1441 = vperm.slane %v1416, 0
        %v1443 = vmul.f32 %v1439, %v1441
        %v1445 = vperm.slane %v1417, 0
        %v1447 = vadd.f32 %v1443, %v1445
        %1448 = vst.msk [vmem:[#allocation2] sm:$0xff] %vm1028, %v1447
        %p1449 = scmp.eq.s32.totalorder %s49, 1
        // Predicated region
        $region125: #{tpu_custom_call.1} parent=91 // pred_check
          %p1450 = pneg %p1449
        $region126: #{tpu_custom_call.1} parent=91 // pred_check_branch
          %1452 = sbr.rel (%p1450) target = $region128
        $region127: #{tpu_custom_call.1} parent=91 // pred_region
          %v1453 = vld [vmem:[%s780] sm:$0xff]
          %v1454 = vadd.f32 %v1453, %v1447
          %1455 = vst.msk [vmem:[%s956] sm:$0xff] %vm1028, %v1454
        $region128: #{tpu_custom_call.1} parent=91 // pred_fallthru
          _
        %s1456 = sand.u32 %s532, 1
        %s1457 = scalar_lea.sflag [#allocation6], %s1456
        %s1458 = sand.u32 %s532, 1
        %s1459 = smul.addr %s1458, 8
        %s1460 = scalar_lea.vmem [#allocation16], %s1459
        // Predicated region
        $region129: #{tpu_custom_call.1} parent=91 // pred_check
          %p1461 = pneg %p542
        $region130: #{tpu_custom_call.1} parent=91 // pred_check_branch
          %1463 = sbr.rel (%p1461) target = $region132
        $region131: #{tpu_custom_call.1} parent=91 // pred_region
          %1465 = vsyncadd %s1457, 0
          %s1466 = smul.addr %s48, 8
          %s1467 = scalar_lea.hbm %s18, %s1466
          %s1469 = sshll.u32 %s1460, 4
          %s1470 = int_to_ptr.vmem [resolvable:$true] %s1469
          %s1471 = sshll.u32 %s1467, 4
          %s1472 = int_to_ptr.hbm [resolvable:$true] %s1471
          %1474 = dma.vmem_to_hbm [thread:$0]  %s1470, 128, %s1472, %s1457
        $region132: #{tpu_custom_call.1} parent=91 // pred_fallthru
          _
      $region92: #{tpu_custom_call.1} parent=5 // pred_fallthru
        _
      %p1475 = scmp.le.s32.totalorder 2, %s39
      // Predicated region
      $region133: #{tpu_custom_call.1} parent=5 // pred_check
        %p1476 = pneg %p1475
      $region134: #{tpu_custom_call.1} parent=5 // pred_check_branch
        %1478 = sbr.rel (%p1476) target = $region136
      $region135: #{tpu_custom_call.1} parent=5 // pred_region
        %s1479 = ssub.s32 %s39, 2
        // Predicated region
        $region137: #{tpu_custom_call.1} parent=135 // pred_check
          %p1480 = pneg %p548
        $region138: #{tpu_custom_call.1} parent=135 // pred_check_branch
          %1482 = sbr.rel (%p1480) target = $region140
        $region139: #{tpu_custom_call.1} parent=135 // pred_region
          %s1483 = sand.u32 %s533, 1
          %s1484 = scalar_lea.sflag [#allocation6], %s1483
          %s1485 = sand.u32 %s533, 1
          %s1486 = smul.addr %s1485, 8
          %s1487 = scalar_lea.vmem [#allocation16], %s1486
          %1489 = dma.done %s1484, 128
        $region140: #{tpu_custom_call.1} parent=135 // pred_fallthru
          _
      $region136: #{tpu_custom_call.1} parent=5 // pred_fallthru
        _
    $region6: #{tpu_custom_call.1} parent=1 // loop_footer
      %s43 = sadd.s32 1, %s39
    $region7: #{tpu_custom_call.1} parent=1 // loop_footer_branch
      %38 = sbr.rel target = $region3
    $region8: #{tpu_custom_call.1} parent=1 // loop_exit
      _
    %1490 = vsyncpa [#allocation5], 1
    %s1491 = scalar_lea.sflag [#allocation5], 1
    %1492 = vsyncpa %s1491, 1
    %1493 = vsyncpa [#allocation8], 1
    %s1494 = scalar_lea.sflag [#allocation8], 1
    %1495 = vsyncpa %s1494, 1
    %1496 = vsyncpa [#allocation11], 1
    %s1497 = scalar_lea.sflag [#allocation11], 1
    %1498 = vsyncpa %s1497, 1
    %1499 = vsyncpa [#allocation14], 1
    %s1500 = scalar_lea.sflag [#allocation14], 1
    %1501 = vsyncpa %s1500, 1
    %1502 = vsyncpa [#allocation6], 1
    %s1503 = scalar_lea.sflag [#allocation6], 1
    %1504 = vsyncpa %s1503, 1

</llo_original>
